<compile_context>
chip_gen: v6e
topology: v6e:2x2x1
jax: 0.10.0
libtpu: 0.0.40
codegen_flags: <defaults>
</compile_context>

<pallas_src>
import math
import functools

import jax
import jax.numpy as jnp
from jax.experimental import pallas as pl
from jax.experimental.pallas import tpu as pltpu


def _round_up(x, m):
    return ((x + m - 1) // m) * m


def _blk_bytes(rows, cols, itemsize):
    # VMEM blocks are padded to (8, 128) tiles.
    return _round_up(max(rows, 1), 8) * _round_up(max(cols, 1), 128) * itemsize


def _vmem_limit(estimate_bytes):
    # Raise the scoped-VMEM limit to cover the estimated working set (with margin),
    # never above v7x's 64 MiB physical VMEM (safe on v5e/v6e as well).
    return int(min(64 * 1024 * 1024, max(32 * 1024 * 1024, (estimate_bytes * 3) // 2)))


# ----------------------------- Tiled linear (x @ W^T + b) -----------------------------

_TILE_CANDIDATES = (512, 384, 256, 128)


def _pick_tile(dim, candidates=_TILE_CANDIDATES):
    """Pick (tile, padded_dim) minimising padding.

    If the whole dim fits in the largest candidate, use one full-extent tile
    (legal regardless of alignment, zero padding). Otherwise pick the candidate
    with the least padding, ties broken toward the larger tile."""
    if dim <= max(candidates):
        return dim, dim
    tile = min(candidates, key=lambda c: (_round_up(dim, c) - dim, -c))
    return tile, _round_up(dim, tile)


def _linear_kernel(x_ref, w_ref, b_ref, o_ref, acc_ref, *, mxu_dtype):
    # x: (tm, tk), w: (tn, tk) (torch nn.Linear layout), b: (1, tn), o: (tm, tn)
    @pl.when(pl.program_id(2) == 0)
    def _():
        acc_ref[...] = jnp.zeros_like(acc_ref)

    x = x_ref[...]
    w = w_ref[...]
    if mxu_dtype is not None:      # bf16 operands for v6e/v7x MXUs; f32 accumulation kept
        x = x.astype(mxu_dtype)
        w = w.astype(mxu_dtype)

    # Contract both operands on their last dim -> feeds the MXU without a transpose.
    acc_ref[...] += jax.lax.dot_general(
        x, w, dimension_numbers=(((1,), (1,)), ((), ())),
        preferred_element_type=jnp.float32)

    @pl.when(pl.program_id(2) == pl.num_programs(2) - 1)
    def _():
        o_ref[...] = (acc_ref[...] + b_ref[...].astype(jnp.float32)).astype(o_ref.dtype)


def linear_pallas(x2d, w, b, *, mxu_dtype=None):
    """x2d: (M, Din), w: (Dout, Din), b: (Dout,) -> (M, Dout) = x2d @ w.T + b."""
    M, K = x2d.shape
    N = w.shape[0]

    tm, Mp = _pick_tile(M)
    tn, Np = _pick_tile(N)
    tk, Kp = _pick_tile(K)

    xp = x2d if (Mp == M and Kp == K) else jnp.pad(x2d, ((0, Mp - M), (0, Kp - K)))
    wp = w if (Np == N and Kp == K) else jnp.pad(w, ((0, Np - N), (0, Kp - K)))
    bp = b.reshape(1, N)
    if Np != N:
        bp = jnp.pad(bp, ((0, 0), (0, Np - N)))

    isz = jnp.dtype(x2d.dtype).itemsize
    est = (2 * (_blk_bytes(tm, tk, isz) + _blk_bytes(tn, tk, isz)
                + _blk_bytes(1, tn, isz) + _blk_bytes(tm, tn, isz))
           + _blk_bytes(tm, tn, 4))

    grid = (Mp // tm, Np // tn, Kp // tk)
    out = pl.pallas_call(
        functools.partial(_linear_kernel, mxu_dtype=mxu_dtype),
        out_shape=jax.ShapeDtypeStruct((Mp, Np), x2d.dtype),
        grid_spec=pltpu.PrefetchScalarGridSpec(
            num_scalar_prefetch=0,
            grid=grid,
            in_specs=[
                pl.BlockSpec((tm, tk), lambda i, j, k: (i, k)),
                pl.BlockSpec((tn, tk), lambda i, j, k: (j, k)),
                pl.BlockSpec((1, tn), lambda i, j, k: (0, j)),
            ],
            out_specs=pl.BlockSpec((tm, tn), lambda i, j, k: (i, j)),
            scratch_shapes=[pltpu.VMEM((tm, tn), jnp.float32)],
        ),
        compiler_params=pltpu.CompilerParams(
            dimension_semantics=("parallel", "parallel", "arbitrary"),
            vmem_limit_bytes=_vmem_limit(est)),
    )(xp, wp, bp)

    if Mp != M or Np != N:
        out = out[:M, :N]
    return out


# ------------------------- Reprogramming attention (all heads fused) -------------------------

def _attn_kernel(q_ref, k_ref, v_ref, o_ref, *rest,
                 n_heads, d_keys, scale, mxu_dtype, has_attn):
    # q: (1, tL, H*E), k/v: (S, H*E), o: (1, tL, H*E), a (optional): (1, H, tL, S)
    if has_attn:
        a_ref, o_acc = rest
    else:
        (o_acc,) = rest
    H, E = n_heads, d_keys

    # Static unroll over heads (H is small); per-head slices are taken directly from
    # the refs and per-head results are written out immediately to keep live ranges
    # (and vreg pressure / spills) bounded.
    for h in range(H):
        lo = h * E
        qh = q_ref[0, :, lo:lo + E]           # (tL, E)
        kh = k_ref[:, lo:lo + E]              # (S, E)
        vh = v_ref[:, lo:lo + E]              # (S, E)
        if mxu_dtype is not None:
            qh = qh.astype(mxu_dtype)
            kh = kh.astype(mxu_dtype)

        s = jax.lax.dot_general(
            qh, kh, dimension_numbers=(((1,), (1,)), ((), ())),
            preferred_element_type=jnp.float32) * scale            # (tL, S)
        m = jnp.max(s, axis=-1, keepdims=True)
        p = jnp.exp(s - m)
        # Exact reciprocal of the (tL, 1) row sums: negligible cost, matches the
        # torch softmax (the approx EUP reciprocal drifted ~1e-3 per the review).
        a = p * (1.0 / jnp.sum(p, axis=-1, keepdims=True))

        # TODO(synk): nn.Dropout(attention_dropout) is identity in eval mode; not applied.
        if has_attn:
            a_ref[0, h] = a.astype(a_ref.dtype)    # full (tL, S) plane -> lane-dense store

        av = a.astype(mxu_dtype) if mxu_dtype is not None else a
        vv = vh.astype(mxu_dtype) if mxu_dtype is not None else vh.astype(jnp.float32)
        oh = jax.lax.dot_general(
            av, vv, dimension_numbers=(((1,), (0,)), ((), ())),
            preferred_element_type=jnp.float32)                    # (tL, E)
        o_acc[:, lo:lo + E] = oh               # accumulate into full-width VMEM scratch

    # ONE lane-dense (tL, H*E) store to the output block (the big measured lever).
    o_ref[0] = o_acc[...].astype(o_ref.dtype)


def reprogramming_attention(q_ble, k_se, v_se, *, n_heads, d_keys,
                            return_attention=True, attn_dtype=jnp.float32,
                            mxu_dtype=None):
    """q: (B, L, H*E), k/v: (S, H*E) -> (out (B, L, H*E), attn (B, H, L, S) or None)."""
    B, L, HE = q_ble.shape
    S = k_se.shape[0]
    H, E = n_heads, d_keys
    scale = 1.0 / math.sqrt(E)
    isz = jnp.dtype(q_ble.dtype).itemsize
    a_isz = jnp.dtype(attn_dtype).itemsize

    def _estimate(tl):
        q_b = _blk_bytes(tl, HE, isz)          # Q block (== O block)
        kv_b = _blk_bytes(S, HE, isz)          # K or V block
        a_b = H * _blk_bytes(tl, S, a_isz) if return_attention else 0
        scratch = _blk_bytes(tl, HE, 4)
        return 2 * (2 * q_b + a_b + 2 * kv_b) + scratch   # x2 for double-buffering

    # L tile: bounds VMEM independent of L (sized against a ~48 MiB budget so it also
    # fits v7x's 64 MiB VMEM) and gives megacore a second parallel axis.
    tL = min(_round_up(L, 8), 128)
    while tL > 8 and _estimate(tL) > 48 * 1024 * 1024:
        tL = max(8, _round_up(tL // 2, 8))
    Lp = _round_up(L, tL)
    qp = q_ble if Lp == L else jnp.pad(q_ble, ((0, 0), (0, Lp - L), (0, 0)))

    out_shape = [jax.ShapeDtypeStruct((B, Lp, HE), q_ble.dtype)]
    out_specs = [pl.BlockSpec((1, tL, HE), lambda b, l: (b, l, 0))]
    if return_attention:
        out_shape.append(jax.ShapeDtypeStruct((B, H, Lp, S), attn_dtype))
        out_specs.append(pl.BlockSpec((1, H, tL, S), lambda b, l: (b, 0, l, 0)))

    kernel = functools.partial(_attn_kernel, n_heads=H, d_keys=E, scale=scale,
                               mxu_dtype=mxu_dtype, has_attn=return_attention)
    results = pl.pallas_call(
        kernel,
        out_shape=tuple(out_shape),
        grid_spec=pltpu.PrefetchScalarGridSpec(
            num_scalar_prefetch=0,
            grid=(B, Lp // tL),
            in_specs=[
                pl.BlockSpec((1, tL, HE), lambda b, l: (b, l, 0)),
                # K/V index maps are constant -> blocks fetched once, not B*nL times.
                # (pl.Buffered(1) could halve their VMEM footprint; left at the
                #  default double-buffering for compile safety.)
                pl.BlockSpec((S, HE), lambda b, l: (0, 0)),
                pl.BlockSpec((S, HE), lambda b, l: (0, 0)),
            ],
            out_specs=out_specs,
            scratch_shapes=[pltpu.VMEM((tL, HE), jnp.float32)],
        ),
        compiler_params=pltpu.CompilerParams(
            dimension_semantics=("parallel", "parallel"),
            vmem_limit_bytes=_vmem_limit(_estimate(tL))),
    )(qp, k_se, v_se)

    if not isinstance(results, (list, tuple)):
        results = (results,)
    out = results[0]
    attn = results[1] if return_attention else None
    if Lp != L:
        out = out[:, :L]
        if attn is not None:
            attn = attn[:, :, :L]
    return out, attn


# ------------------------------- Full forward pass -------------------------------

def reprogramming_layer_forward(params, target_embedding, source_embedding,
                                value_embedding, n_heads, *,
                                return_attention=True, attn_dtype=jnp.float32,
                                mxu_dtype=None):
    B, L, d_model = target_embedding.shape
    S, d_llm = source_embedding.shape
    H = n_heads

    # Projections (tiled Pallas linears).
    q = linear_pallas(target_embedding.reshape(B * L, d_model),
                      params["wq"], params["bq"], mxu_dtype=mxu_dtype)   # (B*L, H*E)
    k = linear_pallas(source_embedding, params["wk"], params["bk"],
                      mxu_dtype=mxu_dtype)                               # (S, H*E)
    v = linear_pallas(value_embedding, params["wv"], params["bv"],
                      mxu_dtype=mxu_dtype)                               # (S, H*E)

    HE = q.shape[-1]
    E = HE // H

    # Pure metadata reshape (no transpose / HBM round-trip); head split happens in-kernel.
    out_ble, attn = reprogramming_attention(
        q.reshape(B, L, HE), k, v, n_heads=H, d_keys=E,
        return_attention=return_attention, attn_dtype=attn_dtype,
        mxu_dtype=mxu_dtype)                                             # (B, L, H*E)

    # TODO(synk): out-projection could be fused into the attention kernel to save one
    # (B, L, H*E) HBM round-trip; kept as a separate tiled linear for clarity.
    out = linear_pallas(out_ble.reshape(B * L, HE), params["wo"], params["bo"],
                        mxu_dtype=mxu_dtype)                             # (B*L, d_llm)
    return out.reshape(B, L, d_llm), attn


def init_params(key, d_model, n_heads, d_llm, d_keys=None):
    d_keys = d_keys or d_model // n_heads
    dk = d_keys * n_heads
    ks = jax.random.split(key, 8)

    def lin(kw, kb, fan_in, fan_out):
        bound = 1.0 / math.sqrt(fan_in)
        w = jax.random.uniform(kw, (fan_out, fan_in), jnp.float32, -bound, bound)
        b = jax.random.uniform(kb, (fan_out,), jnp.float32, -bound, bound)
        return w, b

    wq, bq = lin(ks[0], ks[1], d_model, dk)
    wk, bk = lin(ks[2], ks[3], d_llm, dk)
    wv, bv = lin(ks[4], ks[5], d_llm, dk)
    wo, bo = lin(ks[6], ks[7], dk, d_llm)
    return dict(wq=wq, bq=bq, wk=wk, bk=bk, wv=wv, bv=bv, wo=wo, bo=bo)


if __name__ == "__main__":
    key = jax.random.PRNGKey(0)
    B, L, S = 2, 8, 16
    d_model, n_heads, d_llm = 32, 4, 64   # d_keys = d_model // n_heads = 8

    kp, kt, ksrc, kv = jax.random.split(key, 4)
    params = init_params(kp, d_model, n_heads, d_llm)

    target_embedding = jax.random.normal(kt, (B, L, d_model), jnp.float32)
    source_embedding = jax.random.normal(ksrc, (S, d_llm), jnp.float32)
    value_embedding = jax.random.normal(kv, (S, d_llm), jnp.float32)

    fwd = jax.jit(functools.partial(reprogramming_layer_forward, n_heads=n_heads))
    out, attn = fwd(params, target_embedding, source_embedding, value_embedding)
    jax.block_until_ready((out, attn))

    assert out.shape == (B, L, d_llm)
    assert attn.shape == (B, n_heads, L, S)

    # Pure-JAX fp32 reference (mirrors the torch forward).
    def ref_forward(p, te, se, ve):
        E = d_model // n_heads
        qr = (te.reshape(B * L, d_model) @ p["wq"].T + p["bq"]).reshape(B, L, n_heads, E)
        kr = (se @ p["wk"].T + p["bk"]).reshape(S, n_heads, E)
        vr = (ve @ p["wv"].T + p["bv"]).reshape(S, n_heads, E)
        scores = jnp.einsum("blhe,she->bhls", qr, kr)
        A = jax.nn.softmax(scores / math.sqrt(E), axis=-1)
        o = jnp.einsum("bhls,she->blhe", A, vr).reshape(B, L, n_heads * E)
        return (o @ p["wo"].T + p["bo"]).reshape(B, L, d_llm), A

    ref_out, ref_attn = ref_forward(params, target_embedding, source_embedding,
                                    value_embedding)
    assert jnp.allclose(out, ref_out, rtol=1e-4, atol=1e-4)
    assert jnp.allclose(attn, ref_attn, rtol=1e-4, atol=1e-4)
    print("KERNEL_OK")
</pallas_src>

<mosaic_0001>
module attributes {stable_mosaic.version = 11 : i64} {
  func.func @_attn_kernel(%arg0: i32, %arg1: i32, %arg2: memref<1x8x32xf32, #tpu.memory_space<vmem>>, %arg3: memref<16x32xf32, #tpu.memory_space<vmem>>, %arg4: memref<16x32xf32, #tpu.memory_space<vmem>>, %arg5: memref<1x8x32xf32, #tpu.memory_space<vmem>>, %arg6: memref<1x4x8x16xf32, #tpu.memory_space<vmem>>, %arg7: memref<8x32xf32, #tpu.memory_space<vmem>>) attributes {dimension_semantics = [#tpu.dimension_semantics<parallel>, #tpu.dimension_semantics<parallel>], iteration_bounds = array<i64: 2, 1>, scalar_prefetch = 0 : i64, scratch_operands = 1 : i64, tpu.core_type = #tpu.core_type<tc>, window_params = [{transform_indices = @transform_0, window_bounds = array<i64: 1, 8, 32>}, {pipeline_mode = #tpu.pipeline_mode<synchronous>, transform_indices = @transform_1, window_bounds = array<i64: 16, 32>}, {pipeline_mode = #tpu.pipeline_mode<synchronous>, transform_indices = @transform_2, window_bounds = array<i64: 16, 32>}, {transform_indices = @transform_3, window_bounds = array<i64: 1, 8, 32>}, {transform_indices = @transform_4, window_bounds = array<i64: 1, 4, 8, 16>}]} {
    %c0 = arith.constant 0 : index
    %c0_0 = arith.constant 0 : index
    %c0_1 = arith.constant 0 : index
    %0 = vector.load %arg2[%c0, %c0_0, %c0_1] : memref<1x8x32xf32, #tpu.memory_space<vmem>>, vector<1x8x8xf32>
    %1 = vector.shape_cast %0 : vector<1x8x8xf32> to vector<8x8xf32>
    %c0_2 = arith.constant 0 : index
    %c0_3 = arith.constant 0 : index
    %2 = vector.load %arg3[%c0_2, %c0_3] : memref<16x32xf32, #tpu.memory_space<vmem>>, vector<16x8xf32>
    %c0_4 = arith.constant 0 : index
    %c0_5 = arith.constant 0 : index
    %3 = vector.load %arg4[%c0_4, %c0_5] : memref<16x32xf32, #tpu.memory_space<vmem>>, vector<16x8xf32>
    %cst = arith.constant dense<0.000000e+00> : vector<8x16xf32>
    %4 = tpu.matmul %1, %2, %cst {dimension_numbers = #tpu.dot_dimension_numbers<[1], [1], [0], [0], [0, 0, 1, 0], [], []>} : vector<8x8xf32>, vector<16x8xf32>, vector<8x16xf32> -> vector<8x16xf32>
    %cst_6 = arith.constant 0.353553385 : f32
    %5 = vector.broadcast %cst_6 : f32 to vector<8x16xf32>
    %6 = arith.mulf %4, %5 : vector<8x16xf32>
    %cst_7 = arith.constant dense<0xFF800000> : vector<8xf32>
    %7 = vector.multi_reduction <maximumf>, %6, %cst_7 [1] : vector<8x16xf32> to vector<8xf32>
    %8 = vector.shape_cast %7 : vector<8xf32> to vector<8x1xf32>
    %9 = vector.broadcast %8 : vector<8x1xf32> to vector<8x16xf32>
    %10 = arith.subf %6, %9 : vector<8x16xf32>
    %11 = math.exp %10 : vector<8x16xf32>
    %cst_8 = arith.constant dense<0.000000e+00> : vector<8xf32>
    %12 = vector.multi_reduction <add>, %11, %cst_8 [1] : vector<8x16xf32> to vector<8xf32>
    %13 = vector.shape_cast %12 : vector<8xf32> to vector<8x1xf32>
    %cst_9 = arith.constant 1.000000e+00 : f32
    %14 = vector.broadcast %cst_9 : f32 to vector<8x1xf32>
    %15 = arith.divf %14, %13 : vector<8x1xf32>
    %16 = vector.broadcast %15 : vector<8x1xf32> to vector<8x16xf32>
    %17 = arith.mulf %11, %16 : vector<8x16xf32>
    %c0_10 = arith.constant 0 : index
    %c0_11 = arith.constant 0 : index
    %c0_12 = arith.constant 0 : index
    %c0_13 = arith.constant 0 : index
    %18 = vector.load %arg6[%c0_10, %c0_11, %c0_12, %c0_13] : memref<1x4x8x16xf32, #tpu.memory_space<vmem>>, vector<1x1x8x16xf32>
    %19 = vector.shape_cast %18 : vector<1x1x8x16xf32> to vector<8x16xf32>
    %20 = vector.shape_cast %17 : vector<8x16xf32> to vector<1x1x8x16xf32>
    tpu.vector_store %arg6[%c0_10, %c0_11, %c0_12, %c0_13], %20 {strides = array<i32>} : memref<1x4x8x16xf32, #tpu.memory_space<vmem>>, vector<1x1x8x16xf32>,
    %cst_14 = arith.constant dense<0.000000e+00> : vector<8x8xf32>
    %21 = tpu.matmul %17, %3, %cst_14 {dimension_numbers = #tpu.dot_dimension_numbers<[1], [0], [0], [1], [0, 0, 1, 1], [], []>} : vector<8x16xf32>, vector<16x8xf32>, vector<8x8xf32> -> vector<8x8xf32>
    %c0_15 = arith.constant 0 : index
    %c0_16 = arith.constant 0 : index
    %22 = vector.load %arg7[%c0_15, %c0_16] : memref<8x32xf32, #tpu.memory_space<vmem>>, vector<8x8xf32>
    tpu.vector_store %arg7[%c0_15, %c0_16], %21 {strides = array<i32>} : memref<8x32xf32, #tpu.memory_space<vmem>>, vector<8x8xf32>,
    %c0_17 = arith.constant 0 : index
    %c0_18 = arith.constant 0 : index
    %c8 = arith.constant 8 : index
    %23 = vector.load %arg2[%c0_17, %c0_18, %c8] : memref<1x8x32xf32, #tpu.memory_space<vmem>>, vector<1x8x8xf32>
    %24 = vector.shape_cast %23 : vector<1x8x8xf32> to vector<8x8xf32>
    %c0_19 = arith.constant 0 : index
    %c8_20 = arith.constant 8 : index
    %25 = vector.load %arg3[%c0_19, %c8_20] : memref<16x32xf32, #tpu.memory_space<vmem>>, vector<16x8xf32>
    %c0_21 = arith.constant 0 : index
    %c8_22 = arith.constant 8 : index
    %26 = vector.load %arg4[%c0_21, %c8_22] : memref<16x32xf32, #tpu.memory_space<vmem>>, vector<16x8xf32>
    %cst_23 = arith.constant dense<0.000000e+00> : vector<8x16xf32>
    %27 = tpu.matmul %24, %25, %cst_23 {dimension_numbers = #tpu.dot_dimension_numbers<[1], [1], [0], [0], [0, 0, 1, 0], [], []>} : vector<8x8xf32>, vector<16x8xf32>, vector<8x16xf32> -> vector<8x16xf32>
    %cst_24 = arith.constant 0.353553385 : f32
    %28 = vector.broadcast %cst_24 : f32 to vector<8x16xf32>
    %29 = arith.mulf %27, %28 : vector<8x16xf32>
    %cst_25 = arith.constant dense<0xFF800000> : vector<8xf32>
    %30 = vector.multi_reduction <maximumf>, %29, %cst_25 [1] : vector<8x16xf32> to vector<8xf32>
    %31 = vector.shape_cast %30 : vector<8xf32> to vector<8x1xf32>
    %32 = vector.broadcast %31 : vector<8x1xf32> to vector<8x16xf32>
    %33 = arith.subf %29, %32 : vector<8x16xf32>
    %34 = math.exp %33 : vector<8x16xf32>
    %cst_26 = arith.constant dense<0.000000e+00> : vector<8xf32>
    %35 = vector.multi_reduction <add>, %34, %cst_26 [1] : vector<8x16xf32> to vector<8xf32>
    %36 = vector.shape_cast %35 : vector<8xf32> to vector<8x1xf32>
    %cst_27 = arith.constant 1.000000e+00 : f32
    %37 = vector.broadcast %cst_27 : f32 to vector<8x1xf32>
    %38 = arith.divf %37, %36 : vector<8x1xf32>
    %39 = vector.broadcast %38 : vector<8x1xf32> to vector<8x16xf32>
    %40 = arith.mulf %34, %39 : vector<8x16xf32>
    %c0_28 = arith.constant 0 : index
    %c1 = arith.constant 1 : index
    %c0_29 = arith.constant 0 : index
    %c0_30 = arith.constant 0 : index
    %41 = vector.load %arg6[%c0_28, %c1, %c0_29, %c0_30] : memref<1x4x8x16xf32, #tpu.memory_space<vmem>>, vector<1x1x8x16xf32>
    %42 = vector.shape_cast %41 : vector<1x1x8x16xf32> to vector<8x16xf32>
    %43 = vector.shape_cast %40 : vector<8x16xf32> to vector<1x1x8x16xf32>
    tpu.vector_store %arg6[%c0_28, %c1, %c0_29, %c0_30], %43 {strides = array<i32>} : memref<1x4x8x16xf32, #tpu.memory_space<vmem>>, vector<1x1x8x16xf32>,
    %cst_31 = arith.constant dense<0.000000e+00> : vector<8x8xf32>
    %44 = tpu.matmul %40, %26, %cst_31 {dimension_numbers = #tpu.dot_dimension_numbers<[1], [0], [0], [1], [0, 0, 1, 1], [], []>} : vector<8x16xf32>, vector<16x8xf32>, vector<8x8xf32> -> vector<8x8xf32>
    %c0_32 = arith.constant 0 : index
    %c8_33 = arith.constant 8 : index
    %45 = vector.load %arg7[%c0_32, %c8_33] : memref<8x32xf32, #tpu.memory_space<vmem>>, vector<8x8xf32>
    tpu.vector_store %arg7[%c0_32, %c8_33], %44 {strides = array<i32>} : memref<8x32xf32, #tpu.memory_space<vmem>>, vector<8x8xf32>,
    %c0_34 = arith.constant 0 : index
    %c0_35 = arith.constant 0 : index
    %c16 = arith.constant 16 : index
    %46 = vector.load %arg2[%c0_34, %c0_35, %c16] : memref<1x8x32xf32, #tpu.memory_space<vmem>>, vector<1x8x8xf32>
    %47 = vector.shape_cast %46 : vector<1x8x8xf32> to vector<8x8xf32>
    %c0_36 = arith.constant 0 : index
    %c16_37 = arith.constant 16 : index
    %48 = vector.load %arg3[%c0_36, %c16_37] : memref<16x32xf32, #tpu.memory_space<vmem>>, vector<16x8xf32>
    %c0_38 = arith.constant 0 : index
    %c16_39 = arith.constant 16 : index
    %49 = vector.load %arg4[%c0_38, %c16_39] : memref<16x32xf32, #tpu.memory_space<vmem>>, vector<16x8xf32>
    %cst_40 = arith.constant dense<0.000000e+00> : vector<8x16xf32>
    %50 = tpu.matmul %47, %48, %cst_40 {dimension_numbers = #tpu.dot_dimension_numbers<[1], [1], [0], [0], [0, 0, 1, 0], [], []>} : vector<8x8xf32>, vector<16x8xf32>, vector<8x16xf32> -> vector<8x16xf32>
    %cst_41 = arith.constant 0.353553385 : f32
    %51 = vector.broadcast %cst_41 : f32 to vector<8x16xf32>
    %52 = arith.mulf %50, %51 : vector<8x16xf32>
    %cst_42 = arith.constant dense<0xFF800000> : vector<8xf32>
    %53 = vector.multi_reduction <maximumf>, %52, %cst_42 [1] : vector<8x16xf32> to vector<8xf32>
    %54 = vector.shape_cast %53 : vector<8xf32> to vector<8x1xf32>
    %55 = vector.broadcast %54 : vector<8x1xf32> to vector<8x16xf32>
    %56 = arith.subf %52, %55 : vector<8x16xf32>
    %57 = math.exp %56 : vector<8x16xf32>
    %cst_43 = arith.constant dense<0.000000e+00> : vector<8xf32>
    %58 = vector.multi_reduction <add>, %57, %cst_43 [1] : vector<8x16xf32> to vector<8xf32>
    %59 = vector.shape_cast %58 : vector<8xf32> to vector<8x1xf32>
    %cst_44 = arith.constant 1.000000e+00 : f32
    %60 = vector.broadcast %cst_44 : f32 to vector<8x1xf32>
    %61 = arith.divf %60, %59 : vector<8x1xf32>
    %62 = vector.broadcast %61 : vector<8x1xf32> to vector<8x16xf32>
    %63 = arith.mulf %57, %62 : vector<8x16xf32>
    %c0_45 = arith.constant 0 : index
    %c2 = arith.constant 2 : index
    %c0_46 = arith.constant 0 : index
    %c0_47 = arith.constant 0 : index
    %64 = vector.load %arg6[%c0_45, %c2, %c0_46, %c0_47] : memref<1x4x8x16xf32, #tpu.memory_space<vmem>>, vector<1x1x8x16xf32>
    %65 = vector.shape_cast %64 : vector<1x1x8x16xf32> to vector<8x16xf32>
    %66 = vector.shape_cast %63 : vector<8x16xf32> to vector<1x1x8x16xf32>
    tpu.vector_store %arg6[%c0_45, %c2, %c0_46, %c0_47], %66 {strides = array<i32>} : memref<1x4x8x16xf32, #tpu.memory_space<vmem>>, vector<1x1x8x16xf32>,
    %cst_48 = arith.constant dense<0.000000e+00> : vector<8x8xf32>
    %67 = tpu.matmul %63, %49, %cst_48 {dimension_numbers = #tpu.dot_dimension_numbers<[1], [0], [0], [1], [0, 0, 1, 1], [], []>} : vector<8x16xf32>, vector<16x8xf32>, vector<8x8xf32> -> vector<8x8xf32>
    %c0_49 = arith.constant 0 : index
    %c16_50 = arith.constant 16 : index
    %68 = vector.load %arg7[%c0_49, %c16_50] : memref<8x32xf32, #tpu.memory_space<vmem>>, vector<8x8xf32>
    tpu.vector_store %arg7[%c0_49, %c16_50], %67 {strides = array<i32>} : memref<8x32xf32, #tpu.memory_space<vmem>>, vector<8x8xf32>,
    %c0_51 = arith.constant 0 : index
    %c0_52 = arith.constant 0 : index
    %c24 = arith.constant 24 : index
    %69 = vector.load %arg2[%c0_51, %c0_52, %c24] : memref<1x8x32xf32, #tpu.memory_space<vmem>>, vector<1x8x8xf32>
    %70 = vector.shape_cast %69 : vector<1x8x8xf32> to vector<8x8xf32>
    %c0_53 = arith.constant 0 : index
    %c24_54 = arith.constant 24 : index
    %71 = vector.load %arg3[%c0_53, %c24_54] : memref<16x32xf32, #tpu.memory_space<vmem>>, vector<16x8xf32>
    %c0_55 = arith.constant 0 : index
    %c24_56 = arith.constant 24 : index
    %72 = vector.load %arg4[%c0_55, %c24_56] : memref<16x32xf32, #tpu.memory_space<vmem>>, vector<16x8xf32>
    %cst_57 = arith.constant dense<0.000000e+00> : vector<8x16xf32>
    %73 = tpu.matmul %70, %71, %cst_57 {dimension_numbers = #tpu.dot_dimension_numbers<[1], [1], [0], [0], [0, 0, 1, 0], [], []>} : vector<8x8xf32>, vector<16x8xf32>, vector<8x16xf32> -> vector<8x16xf32>
    %cst_58 = arith.constant 0.353553385 : f32
    %74 = vector.broadcast %cst_58 : f32 to vector<8x16xf32>
    %75 = arith.mulf %73, %74 : vector<8x16xf32>
    %cst_59 = arith.constant dense<0xFF800000> : vector<8xf32>
    %76 = vector.multi_reduction <maximumf>, %75, %cst_59 [1] : vector<8x16xf32> to vector<8xf32>
    %77 = vector.shape_cast %76 : vector<8xf32> to vector<8x1xf32>
    %78 = vector.broadcast %77 : vector<8x1xf32> to vector<8x16xf32>
    %79 = arith.subf %75, %78 : vector<8x16xf32>
    %80 = math.exp %79 : vector<8x16xf32>
    %cst_60 = arith.constant dense<0.000000e+00> : vector<8xf32>
    %81 = vector.multi_reduction <add>, %80, %cst_60 [1] : vector<8x16xf32> to vector<8xf32>
    %82 = vector.shape_cast %81 : vector<8xf32> to vector<8x1xf32>
    %cst_61 = arith.constant 1.000000e+00 : f32
    %83 = vector.broadcast %cst_61 : f32 to vector<8x1xf32>
    %84 = arith.divf %83, %82 : vector<8x1xf32>
    %85 = vector.broadcast %84 : vector<8x1xf32> to vector<8x16xf32>
    %86 = arith.mulf %80, %85 : vector<8x16xf32>
    %c0_62 = arith.constant 0 : index
    %c3 = arith.constant 3 : index
    %c0_63 = arith.constant 0 : index
    %c0_64 = arith.constant 0 : index
    %87 = vector.load %arg6[%c0_62, %c3, %c0_63, %c0_64] : memref<1x4x8x16xf32, #tpu.memory_space<vmem>>, vector<1x1x8x16xf32>
    %88 = vector.shape_cast %87 : vector<1x1x8x16xf32> to vector<8x16xf32>
    %89 = vector.shape_cast %86 : vector<8x16xf32> to vector<1x1x8x16xf32>
    tpu.vector_store %arg6[%c0_62, %c3, %c0_63, %c0_64], %89 {strides = array<i32>} : memref<1x4x8x16xf32, #tpu.memory_space<vmem>>, vector<1x1x8x16xf32>,
    %cst_65 = arith.constant dense<0.000000e+00> : vector<8x8xf32>
    %90 = tpu.matmul %86, %72, %cst_65 {dimension_numbers = #tpu.dot_dimension_numbers<[1], [0], [0], [1], [0, 0, 1, 1], [], []>} : vector<8x16xf32>, vector<16x8xf32>, vector<8x8xf32> -> vector<8x8xf32>
    %c0_66 = arith.constant 0 : index
    %c24_67 = arith.constant 24 : index
    %91 = vector.load %arg7[%c0_66, %c24_67] : memref<8x32xf32, #tpu.memory_space<vmem>>, vector<8x8xf32>
    tpu.vector_store %arg7[%c0_66, %c24_67], %90 {strides = array<i32>} : memref<8x32xf32, #tpu.memory_space<vmem>>, vector<8x8xf32>,
    %c0_68 = arith.constant 0 : index
    %c0_69 = arith.constant 0 : index
    %92 = vector.load %arg7[%c0_68, %c0_69] : memref<8x32xf32, #tpu.memory_space<vmem>>, vector<8x32xf32>
    %c0_70 = arith.constant 0 : index
    %c0_71 = arith.constant 0 : index
    %c0_72 = arith.constant 0 : index
    %93 = vector.load %arg5[%c0_70, %c0_71, %c0_72] : memref<1x8x32xf32, #tpu.memory_space<vmem>>, vector<1x8x32xf32>
    %94 = vector.shape_cast %93 : vector<1x8x32xf32> to vector<8x32xf32>
    %95 = vector.shape_cast %92 : vector<8x32xf32> to vector<1x8x32xf32>
    tpu.vector_store %arg5[%c0_70, %c0_71, %c0_72], %95 {strides = array<i32>} : memref<1x8x32xf32, #tpu.memory_space<vmem>>, vector<1x8x32xf32>,
    return
  }
  func.func @transform_0(%arg0: i32, %arg1: i32) -> (i32, i32, i32) {
    %c0_i32 = arith.constant 0 : i32
    %c0_i32_0 = arith.constant 0 : i32
    return %arg0, %arg1, %c0_i32 : i32, i32, i32
  }
  func.func @transform_1(%arg0: i32, %arg1: i32) -> (i32, i32) {
    %c0_i32 = arith.constant 0 : i32
    %c0_i32_0 = arith.constant 0 : i32
    %c0_i32_1 = arith.constant 0 : i32
    return %c0_i32, %c0_i32_0 : i32, i32
  }
  func.func @transform_2(%arg0: i32, %arg1: i32) -> (i32, i32) {
    %c0_i32 = arith.constant 0 : i32
    %c0_i32_0 = arith.constant 0 : i32
    %c0_i32_1 = arith.constant 0 : i32
    return %c0_i32, %c0_i32_0 : i32, i32
  }
  func.func @transform_3(%arg0: i32, %arg1: i32) -> (i32, i32, i32) {
    %c0_i32 = arith.constant 0 : i32
    %c0_i32_0 = arith.constant 0 : i32
    return %arg0, %arg1, %c0_i32 : i32, i32, i32
  }
  func.func @transform_4(%arg0: i32, %arg1: i32) -> (i32, i32, i32, i32) {
    %c0_i32 = arith.constant 0 : i32
    %c0_i32_0 = arith.constant 0 : i32
    %c0_i32_1 = arith.constant 0 : i32
    return %arg0, %c0_i32, %arg1, %c0_i32_0 : i32, i32, i32, i32
  }
}

module attributes {stable_mosaic.version = 11 : i64} {
  func.func @_linear_kernel(%arg0: i32, %arg1: i32, %arg2: i32, %arg3: memref<16x64xf32, #tpu.memory_space<vmem>>, %arg4: memref<32x64xf32, #tpu.memory_space<vmem>>, %arg5: memref<1x32xf32, #tpu.memory_space<vmem>>, %arg6: memref<16x32xf32, #tpu.memory_space<vmem>>, %arg7: memref<16x32xf32, #tpu.memory_space<vmem>>) attributes {dimension_semantics = [#tpu.dimension_semantics<parallel>, #tpu.dimension_semantics<parallel>, #tpu.dimension_semantics<arbitrary>], iteration_bounds = array<i64: 1, 1, 1>, scalar_prefetch = 0 : i64, scratch_operands = 1 : i64, tpu.core_type = #tpu.core_type<tc>, window_params = [{transform_indices = @transform_0, window_bounds = array<i64: 16, 64>}, {transform_indices = @transform_1, window_bounds = array<i64: 32, 64>}, {transform_indices = @transform_2, window_bounds = array<i64: 1, 32>}, {transform_indices = @transform_3, window_bounds = array<i64: 16, 32>}]} {
    %c0_i32 = arith.constant 0 : i32
    %0 = arith.cmpi eq, %arg2, %c0_i32 : i32
    %1 = arith.extui %0 : i1 to i32
    %c0_i32_0 = arith.constant 0 : i32
    %2 = arith.cmpi ne, %1, %c0_i32_0 : i32
    scf.if %2 {
      %cst_10 = arith.constant 0.000000e+00 : f32
      %12 = vector.broadcast %cst_10 : f32 to vector<16x32xf32>
      %c0_11 = arith.constant 0 : index
      %c0_12 = arith.constant 0 : index
      %13 = vector.load %arg7[%c0_11, %c0_12] : memref<16x32xf32, #tpu.memory_space<vmem>>, vector<16x32xf32>
      tpu.vector_store %arg7[%c0_11, %c0_12], %12 {strides = array<i32>} : memref<16x32xf32, #tpu.memory_space<vmem>>, vector<16x32xf32>,
    } else {
    }
    %c0 = arith.constant 0 : index
    %c0_1 = arith.constant 0 : index
    %3 = vector.load %arg3[%c0, %c0_1] : memref<16x64xf32, #tpu.memory_space<vmem>>, vector<16x64xf32>
    %c0_2 = arith.constant 0 : index
    %c0_3 = arith.constant 0 : index
    %4 = vector.load %arg4[%c0_2, %c0_3] : memref<32x64xf32, #tpu.memory_space<vmem>>, vector<32x64xf32>
    %c0_4 = arith.constant 0 : index
    %c0_5 = arith.constant 0 : index
    %5 = vector.load %arg7[%c0_4, %c0_5] : memref<16x32xf32, #tpu.memory_space<vmem>>, vector<16x32xf32>
    %cst = arith.constant dense<0.000000e+00> : vector<16x32xf32>
    %6 = tpu.matmul %3, %4, %cst {dimension_numbers = #tpu.dot_dimension_numbers<[1], [1], [0], [0], [0, 0, 1, 0], [], []>} : vector<16x64xf32>, vector<32x64xf32>, vector<16x32xf32> -> vector<16x32xf32>
    %7 = arith.addf %5, %6 : vector<16x32xf32>
    %c0_6 = arith.constant 0 : index
    %c0_7 = arith.constant 0 : index
    %8 = vector.load %arg7[%c0_6, %c0_7] : memref<16x32xf32, #tpu.memory_space<vmem>>, vector<16x32xf32>
    tpu.vector_store %arg7[%c0_6, %c0_7], %7 {strides = array<i32>} : memref<16x32xf32, #tpu.memory_space<vmem>>, vector<16x32xf32>,
    %c0_i32_8 = arith.constant 0 : i32
    %9 = arith.cmpi eq, %arg2, %c0_i32_8 : i32
    %10 = arith.extui %9 : i1 to i32
    %c0_i32_9 = arith.constant 0 : i32
    %11 = arith.cmpi ne, %10, %c0_i32_9 : i32
    scf.if %11 {
      %c0_10 = arith.constant 0 : index
      %c0_11 = arith.constant 0 : index
      %12 = vector.load %arg7[%c0_10, %c0_11] : memref<16x32xf32, #tpu.memory_space<vmem>>, vector<16x32xf32>
      %c0_12 = arith.constant 0 : index
      %c0_13 = arith.constant 0 : index
      %13 = vector.load %arg5[%c0_12, %c0_13] : memref<1x32xf32, #tpu.memory_space<vmem>>, vector<1x32xf32>
      %14 = vector.broadcast %13 : vector<1x32xf32> to vector<16x32xf32>
      %15 = arith.addf %12, %14 : vector<16x32xf32>
      %c0_14 = arith.constant 0 : index
      %c0_15 = arith.constant 0 : index
      %16 = vector.load %arg6[%c0_14, %c0_15] : memref<16x32xf32, #tpu.memory_space<vmem>>, vector<16x32xf32>
      tpu.vector_store %arg6[%c0_14, %c0_15], %15 {strides = array<i32>} : memref<16x32xf32, #tpu.memory_space<vmem>>, vector<16x32xf32>,
    } else {
    }
    return
  }
  func.func @transform_0(%arg0: i32, %arg1: i32, %arg2: i32) -> (i32, i32) {
    %c0_i32 = arith.constant 0 : i32
    return %arg0, %arg2 : i32, i32
  }
  func.func @transform_1(%arg0: i32, %arg1: i32, %arg2: i32) -> (i32, i32) {
    %c0_i32 = arith.constant 0 : i32
    return %arg1, %arg2 : i32, i32
  }
  func.func @transform_2(%arg0: i32, %arg1: i32, %arg2: i32) -> (i32, i32) {
    %c0_i32 = arith.constant 0 : i32
    %c0_i32_0 = arith.constant 0 : i32
    return %c0_i32, %arg1 : i32, i32
  }
  func.func @transform_3(%arg0: i32, %arg1: i32, %arg2: i32) -> (i32, i32) {
    %c0_i32 = arith.constant 0 : i32
    return %arg0, %arg1 : i32, i32
  }
}

module attributes {stable_mosaic.version = 11 : i64} {
  func.func @_linear_kernel(%arg0: i32, %arg1: i32, %arg2: i32, %arg3: memref<16x32xf32, #tpu.memory_space<vmem>>, %arg4: memref<32x32xf32, #tpu.memory_space<vmem>>, %arg5: memref<1x32xf32, #tpu.memory_space<vmem>>, %arg6: memref<16x32xf32, #tpu.memory_space<vmem>>, %arg7: memref<16x32xf32, #tpu.memory_space<vmem>>) attributes {dimension_semantics = [#tpu.dimension_semantics<parallel>, #tpu.dimension_semantics<parallel>, #tpu.dimension_semantics<arbitrary>], iteration_bounds = array<i64: 1, 1, 1>, scalar_prefetch = 0 : i64, scratch_operands = 1 : i64, tpu.core_type = #tpu.core_type<tc>, window_params = [{transform_indices = @transform_0, window_bounds = array<i64: 16, 32>}, {transform_indices = @transform_1, window_bounds = array<i64: 32, 32>}, {transform_indices = @transform_2, window_bounds = array<i64: 1, 32>}, {transform_indices = @transform_3, window_bounds = array<i64: 16, 32>}]} {
    %c0_i32 = arith.constant 0 : i32
    %0 = arith.cmpi eq, %arg2, %c0_i32 : i32
    %1 = arith.extui %0 : i1 to i32
    %c0_i32_0 = arith.constant 0 : i32
    %2 = arith.cmpi ne, %1, %c0_i32_0 : i32
    scf.if %2 {
      %cst_10 = arith.constant 0.000000e+00 : f32
      %12 = vector.broadcast %cst_10 : f32 to vector<16x32xf32>
      %c0_11 = arith.constant 0 : index
      %c0_12 = arith.constant 0 : index
      %13 = vector.load %arg7[%c0_11, %c0_12] : memref<16x32xf32, #tpu.memory_space<vmem>>, vector<16x32xf32>
      tpu.vector_store %arg7[%c0_11, %c0_12], %12 {strides = array<i32>} : memref<16x32xf32, #tpu.memory_space<vmem>>, vector<16x32xf32>,
    } else {
    }
    %c0 = arith.constant 0 : index
    %c0_1 = arith.constant 0 : index
    %3 = vector.load %arg3[%c0, %c0_1] : memref<16x32xf32, #tpu.memory_space<vmem>>, vector<16x32xf32>
    %c0_2 = arith.constant 0 : index
    %c0_3 = arith.constant 0 : index
    %4 = vector.load %arg4[%c0_2, %c0_3] : memref<32x32xf32, #tpu.memory_space<vmem>>, vector<32x32xf32>
    %c0_4 = arith.constant 0 : index
    %c0_5 = arith.constant 0 : index
    %5 = vector.load %arg7[%c0_4, %c0_5] : memref<16x32xf32, #tpu.memory_space<vmem>>, vector<16x32xf32>
    %cst = arith.constant dense<0.000000e+00> : vector<16x32xf32>
    %6 = tpu.matmul %3, %4, %cst {dimension_numbers = #tpu.dot_dimension_numbers<[1], [1], [0], [0], [0, 0, 1, 0], [], []>} : vector<16x32xf32>, vector<32x32xf32>, vector<16x32xf32> -> vector<16x32xf32>
    %7 = arith.addf %5, %6 : vector<16x32xf32>
    %c0_6 = arith.constant 0 : index
    %c0_7 = arith.constant 0 : index
    %8 = vector.load %arg7[%c0_6, %c0_7] : memref<16x32xf32, #tpu.memory_space<vmem>>, vector<16x32xf32>
    tpu.vector_store %arg7[%c0_6, %c0_7], %7 {strides = array<i32>} : memref<16x32xf32, #tpu.memory_space<vmem>>, vector<16x32xf32>,
    %c0_i32_8 = arith.constant 0 : i32
    %9 = arith.cmpi eq, %arg2, %c0_i32_8 : i32
    %10 = arith.extui %9 : i1 to i32
    %c0_i32_9 = arith.constant 0 : i32
    %11 = arith.cmpi ne, %10, %c0_i32_9 : i32
    scf.if %11 {
      %c0_10 = arith.constant 0 : index
      %c0_11 = arith.constant 0 : index
      %12 = vector.load %arg7[%c0_10, %c0_11] : memref<16x32xf32, #tpu.memory_space<vmem>>, vector<16x32xf32>
      %c0_12 = arith.constant 0 : index
      %c0_13 = arith.constant 0 : index
      %13 = vector.load %arg5[%c0_12, %c0_13] : memref<1x32xf32, #tpu.memory_space<vmem>>, vector<1x32xf32>
      %14 = vector.broadcast %13 : vector<1x32xf32> to vector<16x32xf32>
      %15 = arith.addf %12, %14 : vector<16x32xf32>
      %c0_14 = arith.constant 0 : index
      %c0_15 = arith.constant 0 : index
      %16 = vector.load %arg6[%c0_14, %c0_15] : memref<16x32xf32, #tpu.memory_space<vmem>>, vector<16x32xf32>
      tpu.vector_store %arg6[%c0_14, %c0_15], %15 {strides = array<i32>} : memref<16x32xf32, #tpu.memory_space<vmem>>, vector<16x32xf32>,
    } else {
    }
    return
  }
  func.func @transform_0(%arg0: i32, %arg1: i32, %arg2: i32) -> (i32, i32) {
    %c0_i32 = arith.constant 0 : i32
    return %arg0, %arg2 : i32, i32
  }
  func.func @transform_1(%arg0: i32, %arg1: i32, %arg2: i32) -> (i32, i32) {
    %c0_i32 = arith.constant 0 : i32
    return %arg1, %arg2 : i32, i32
  }
  func.func @transform_2(%arg0: i32, %arg1: i32, %arg2: i32) -> (i32, i32) {
    %c0_i32 = arith.constant 0 : i32
    %c0_i32_0 = arith.constant 0 : i32
    return %c0_i32, %arg1 : i32, i32
  }
  func.func @transform_3(%arg0: i32, %arg1: i32, %arg2: i32) -> (i32, i32) {
    %c0_i32 = arith.constant 0 : i32
    return %arg0, %arg1 : i32, i32
  }
}

module attributes {stable_mosaic.version = 11 : i64} {
  func.func @_linear_kernel(%arg0: i32, %arg1: i32, %arg2: i32, %arg3: memref<16x64xf32, #tpu.memory_space<vmem>>, %arg4: memref<32x64xf32, #tpu.memory_space<vmem>>, %arg5: memref<1x32xf32, #tpu.memory_space<vmem>>, %arg6: memref<16x32xf32, #tpu.memory_space<vmem>>, %arg7: memref<16x32xf32, #tpu.memory_space<vmem>>) attributes {dimension_semantics = [#tpu.dimension_semantics<parallel>, #tpu.dimension_semantics<parallel>, #tpu.dimension_semantics<arbitrary>], iteration_bounds = array<i64: 1, 1, 1>, scalar_prefetch = 0 : i64, scratch_operands = 1 : i64, tpu.core_type = #tpu.core_type<tc>, window_params = [{transform_indices = @transform_0, window_bounds = array<i64: 16, 64>}, {transform_indices = @transform_1, window_bounds = array<i64: 32, 64>}, {transform_indices = @transform_2, window_bounds = array<i64: 1, 32>}, {transform_indices = @transform_3, window_bounds = array<i64: 16, 32>}]} {
    %c0_i32 = arith.constant 0 : i32
    %0 = arith.cmpi eq, %arg2, %c0_i32 : i32
    %1 = arith.extui %0 : i1 to i32
    %c0_i32_0 = arith.constant 0 : i32
    %2 = arith.cmpi ne, %1, %c0_i32_0 : i32
    scf.if %2 {
      %cst_10 = arith.constant 0.000000e+00 : f32
      %12 = vector.broadcast %cst_10 : f32 to vector<16x32xf32>
      %c0_11 = arith.constant 0 : index
      %c0_12 = arith.constant 0 : index
      %13 = vector.load %arg7[%c0_11, %c0_12] : memref<16x32xf32, #tpu.memory_space<vmem>>, vector<16x32xf32>
      tpu.vector_store %arg7[%c0_11, %c0_12], %12 {strides = array<i32>} : memref<16x32xf32, #tpu.memory_space<vmem>>, vector<16x32xf32>,
    } else {
    }
    %c0 = arith.constant 0 : index
    %c0_1 = arith.constant 0 : index
    %3 = vector.load %arg3[%c0, %c0_1] : memref<16x64xf32, #tpu.memory_space<vmem>>, vector<16x64xf32>
    %c0_2 = arith.constant 0 : index
    %c0_3 = arith.constant 0 : index
    %4 = vector.load %arg4[%c0_2, %c0_3] : memref<32x64xf32, #tpu.memory_space<vmem>>, vector<32x64xf32>
    %c0_4 = arith.constant 0 : index
    %c0_5 = arith.constant 0 : index
    %5 = vector.load %arg7[%c0_4, %c0_5] : memref<16x32xf32, #tpu.memory_space<vmem>>, vector<16x32xf32>
    %cst = arith.constant dense<0.000000e+00> : vector<16x32xf32>
    %6 = tpu.matmul %3, %4, %cst {dimension_numbers = #tpu.dot_dimension_numbers<[1], [1], [0], [0], [0, 0, 1, 0], [], []>} : vector<16x64xf32>, vector<32x64xf32>, vector<16x32xf32> -> vector<16x32xf32>
    %7 = arith.addf %5, %6 : vector<16x32xf32>
    %c0_6 = arith.constant 0 : index
    %c0_7 = arith.constant 0 : index
    %8 = vector.load %arg7[%c0_6, %c0_7] : memref<16x32xf32, #tpu.memory_space<vmem>>, vector<16x32xf32>
    tpu.vector_store %arg7[%c0_6, %c0_7], %7 {strides = array<i32>} : memref<16x32xf32, #tpu.memory_space<vmem>>, vector<16x32xf32>,
    %c0_i32_8 = arith.constant 0 : i32
    %9 = arith.cmpi eq, %arg2, %c0_i32_8 : i32
    %10 = arith.extui %9 : i1 to i32
    %c0_i32_9 = arith.constant 0 : i32
    %11 = arith.cmpi ne, %10, %c0_i32_9 : i32
    scf.if %11 {
      %c0_10 = arith.constant 0 : index
      %c0_11 = arith.constant 0 : index
      %12 = vector.load %arg7[%c0_10, %c0_11] : memref<16x32xf32, #tpu.memory_space<vmem>>, vector<16x32xf32>
      %c0_12 = arith.constant 0 : index
      %c0_13 = arith.constant 0 : index
      %13 = vector.load %arg5[%c0_12, %c0_13] : memref<1x32xf32, #tpu.memory_space<vmem>>, vector<1x32xf32>
      %14 = vector.broadcast %13 : vector<1x32xf32> to vector<16x32xf32>
      %15 = arith.addf %12, %14 : vector<16x32xf32>
      %c0_14 = arith.constant 0 : index
      %c0_15 = arith.constant 0 : index
      %16 = vector.load %arg6[%c0_14, %c0_15] : memref<16x32xf32, #tpu.memory_space<vmem>>, vector<16x32xf32>
      tpu.vector_store %arg6[%c0_14, %c0_15], %15 {strides = array<i32>} : memref<16x32xf32, #tpu.memory_space<vmem>>, vector<16x32xf32>,
    } else {
    }
    return
  }
  func.func @transform_0(%arg0: i32, %arg1: i32, %arg2: i32) -> (i32, i32) {
    %c0_i32 = arith.constant 0 : i32
    return %arg0, %arg2 : i32, i32
  }
  func.func @transform_1(%arg0: i32, %arg1: i32, %arg2: i32) -> (i32, i32) {
    %c0_i32 = arith.constant 0 : i32
    return %arg1, %arg2 : i32, i32
  }
  func.func @transform_2(%arg0: i32, %arg1: i32, %arg2: i32) -> (i32, i32) {
    %c0_i32 = arith.constant 0 : i32
    %c0_i32_0 = arith.constant 0 : i32
    return %c0_i32, %arg1 : i32, i32
  }
  func.func @transform_3(%arg0: i32, %arg1: i32, %arg2: i32) -> (i32, i32) {
    %c0_i32 = arith.constant 0 : i32
    return %arg0, %arg1 : i32, i32
  }
}

module attributes {stable_mosaic.version = 11 : i64} {
  func.func @_linear_kernel(%arg0: i32, %arg1: i32, %arg2: i32, %arg3: memref<16x32xf32, #tpu.memory_space<vmem>>, %arg4: memref<64x32xf32, #tpu.memory_space<vmem>>, %arg5: memref<1x64xf32, #tpu.memory_space<vmem>>, %arg6: memref<16x64xf32, #tpu.memory_space<vmem>>, %arg7: memref<16x64xf32, #tpu.memory_space<vmem>>) attributes {dimension_semantics = [#tpu.dimension_semantics<parallel>, #tpu.dimension_semantics<parallel>, #tpu.dimension_semantics<arbitrary>], iteration_bounds = array<i64: 1, 1, 1>, scalar_prefetch = 0 : i64, scratch_operands = 1 : i64, tpu.core_type = #tpu.core_type<tc>, window_params = [{transform_indices = @transform_0, window_bounds = array<i64: 16, 32>}, {transform_indices = @transform_1, window_bounds = array<i64: 64, 32>}, {transform_indices = @transform_2, window_bounds = array<i64: 1, 64>}, {transform_indices = @transform_3, window_bounds = array<i64: 16, 64>}]} {
    %c0_i32 = arith.constant 0 : i32
    %0 = arith.cmpi eq, %arg2, %c0_i32 : i32
    %1 = arith.extui %0 : i1 to i32
    %c0_i32_0 = arith.constant 0 : i32
    %2 = arith.cmpi ne, %1, %c0_i32_0 : i32
    scf.if %2 {
      %cst_10 = arith.constant 0.000000e+00 : f32
      %12 = vector.broadcast %cst_10 : f32 to vector<16x64xf32>
      %c0_11 = arith.constant 0 : index
      %c0_12 = arith.constant 0 : index
      %13 = vector.load %arg7[%c0_11, %c0_12] : memref<16x64xf32, #tpu.memory_space<vmem>>, vector<16x64xf32>
      tpu.vector_store %arg7[%c0_11, %c0_12], %12 {strides = array<i32>} : memref<16x64xf32, #tpu.memory_space<vmem>>, vector<16x64xf32>,
    } else {
    }
    %c0 = arith.constant 0 : index
    %c0_1 = arith.constant 0 : index
    %3 = vector.load %arg3[%c0, %c0_1] : memref<16x32xf32, #tpu.memory_space<vmem>>, vector<16x32xf32>
    %c0_2 = arith.constant 0 : index
    %c0_3 = arith.constant 0 : index
    %4 = vector.load %arg4[%c0_2, %c0_3] : memref<64x32xf32, #tpu.memory_space<vmem>>, vector<64x32xf32>
    %c0_4 = arith.constant 0 : index
    %c0_5 = arith.constant 0 : index
    %5 = vector.load %arg7[%c0_4, %c0_5] : memref<16x64xf32, #tpu.memory_space<vmem>>, vector<16x64xf32>
    %cst = arith.constant dense<0.000000e+00> : vector<16x64xf32>
    %6 = tpu.matmul %3, %4, %cst {dimension_numbers = #tpu.dot_dimension_numbers<[1], [1], [0], [0], [0, 0, 1, 0], [], []>} : vector<16x32xf32>, vector<64x32xf32>, vector<16x64xf32> -> vector<16x64xf32>
    %7 = arith.addf %5, %6 : vector<16x64xf32>
    %c0_6 = arith.constant 0 : index
    %c0_7 = arith.constant 0 : index
    %8 = vector.load %arg7[%c0_6, %c0_7] : memref<16x64xf32, #tpu.memory_space<vmem>>, vector<16x64xf32>
    tpu.vector_store %arg7[%c0_6, %c0_7], %7 {strides = array<i32>} : memref<16x64xf32, #tpu.memory_space<vmem>>, vector<16x64xf32>,
    %c0_i32_8 = arith.constant 0 : i32
    %9 = arith.cmpi eq, %arg2, %c0_i32_8 : i32
    %10 = arith.extui %9 : i1 to i32
    %c0_i32_9 = arith.constant 0 : i32
    %11 = arith.cmpi ne, %10, %c0_i32_9 : i32
    scf.if %11 {
      %c0_10 = arith.constant 0 : index
      %c0_11 = arith.constant 0 : index
      %12 = vector.load %arg7[%c0_10, %c0_11] : memref<16x64xf32, #tpu.memory_space<vmem>>, vector<16x64xf32>
      %c0_12 = arith.constant 0 : index
      %c0_13 = arith.constant 0 : index
      %13 = vector.load %arg5[%c0_12, %c0_13] : memref<1x64xf32, #tpu.memory_space<vmem>>, vector<1x64xf32>
      %14 = vector.broadcast %13 : vector<1x64xf32> to vector<16x64xf32>
      %15 = arith.addf %12, %14 : vector<16x64xf32>
      %c0_14 = arith.constant 0 : index
      %c0_15 = arith.constant 0 : index
      %16 = vector.load %arg6[%c0_14, %c0_15] : memref<16x64xf32, #tpu.memory_space<vmem>>, vector<16x64xf32>
      tpu.vector_store %arg6[%c0_14, %c0_15], %15 {strides = array<i32>} : memref<16x64xf32, #tpu.memory_space<vmem>>, vector<16x64xf32>,
    } else {
    }
    return
  }
  func.func @transform_0(%arg0: i32, %arg1: i32, %arg2: i32) -> (i32, i32) {
    %c0_i32 = arith.constant 0 : i32
    return %arg0, %arg2 : i32, i32
  }
  func.func @transform_1(%arg0: i32, %arg1: i32, %arg2: i32) -> (i32, i32) {
    %c0_i32 = arith.constant 0 : i32
    return %arg1, %arg2 : i32, i32
  }
  func.func @transform_2(%arg0: i32, %arg1: i32, %arg2: i32) -> (i32, i32) {
    %c0_i32 = arith.constant 0 : i32
    %c0_i32_0 = arith.constant 0 : i32
    return %c0_i32, %arg1 : i32, i32
  }
  func.func @transform_3(%arg0: i32, %arg1: i32, %arg2: i32) -> (i32, i32) {
    %c0_i32 = arith.constant 0 : i32
    return %arg0, %arg1 : i32, i32
  }
}

</mosaic_0001>

<llo_original>
// kernel: reprogramming_layer_forward.7
$region0: #{reprogramming_layer_forward.7}
  #allocation0 [shape = 'u32[]', space=smem, size = 0x4, offset = 0x4, fixed_abs, tag = 'smem constant byte address 0x4 - core index']
  #allocation1 [shape = 'u32[144,128]{1,0:T(1,128)}', space=vmem, size = 0x12000, scoped, tag = 'internal scratch']
  #allocation2 [shape = 'f32[16,32]{1,0:T(8,128)}', space=vmem, size = 0x2000, scoped, tag = 'scratch operand']
  %s0 = inlined_call_operand.vmem [shape: f32[16,64], index: 0, kind: input, shape index: {}]
  %s1 = inlined_call_operand.vmem [shape: f32[32,64], index: 1, kind: input, shape index: {}]
  %s2 = inlined_call_operand.vmem [shape: f32[1,32], index: 2, kind: input, shape index: {}]
  %s3 = inlined_call_operand.vmem [shape: f32[16,32], index: 3, kind: output, shape index: {}]
  %s4 = sld [smem:[#allocation0]]
  $region30: #{reprogramming_layer_forward.7} parent=0
    _
  %s6 = ssub.s32 1, %s4
  %s7 = scalar_select 0, %s6, %s4
  // Predicated region
  $region2: #{reprogramming_layer_forward.7} parent=0 // pred_check
    _
  $region3: #{reprogramming_layer_forward.7} parent=0 // pred_check_branch
    %9 = sbr.rel (0) target = $region5
  $region4: #{reprogramming_layer_forward.7} parent=0 // pred_region
    _
  $region5: #{reprogramming_layer_forward.7} parent=0 // pred_fallthru
    _
  // Predicated region
  $region6: #{reprogramming_layer_forward.7} parent=0 // pred_check
    _
  $region7: #{reprogramming_layer_forward.7} parent=0 // pred_check_branch
    %11 = sbr.rel (0) target = $region9
  $region8: #{reprogramming_layer_forward.7} parent=0 // pred_region
    _
  $region9: #{reprogramming_layer_forward.7} parent=0 // pred_fallthru
    _
  // Predicated region
  $region10: #{reprogramming_layer_forward.7} parent=0 // pred_check
    _
  $region11: #{reprogramming_layer_forward.7} parent=0 // pred_check_branch
    %13 = sbr.rel (0) target = $region13
  $region12: #{reprogramming_layer_forward.7} parent=0 // pred_region
    _
  $region13: #{reprogramming_layer_forward.7} parent=0 // pred_fallthru
    _
  %p14 = scmp.eq.s32.totalorder 0, 0
  // Predicated region
  $region14: #{reprogramming_layer_forward.7} parent=0 // pred_check
    %p15 = pneg %p14
  $region15: #{reprogramming_layer_forward.7} parent=0 // pred_check_branch
    %17 = sbr.rel (%p15) target = $region17
  $region16: #{reprogramming_layer_forward.7} parent=0 // pred_region
    %vm18 = vcmask 261120
    %19 = vst.msk [vmem:[#allocation2] sm:$0xff] %vm18, 0.0
    %20 = vst.msk [vmem:[#allocation2 + $0x8] sm:$0xff] %vm18, 0.0
  $region17: #{reprogramming_layer_forward.7} parent=0 // pred_fallthru
    _
  %v21 = vld [vmem:[%s0] sm:$0xff]
  %v22 = vld [vmem:[%s0 + $0x8] sm:$0xff]
  %v23 = vld [vmem:[%s1] sm:$0xff]
  %v24 = vld [vmem:[%s1 + $0x8] sm:$0xff]
  %v25 = vld [vmem:[%s1 + $0x10] sm:$0xff]
  %v26 = vld [vmem:[%s1 + $0x18] sm:$0xff]
  %v27 = vld [vmem:[#allocation2] sm:$0xff]
  %v28 = vld [vmem:[#allocation2 + $0x8] sm:$0xff]
  %vm29 = vcmask 523264
  %v31 = vsel %vm29, %v21, 0
  %v34 = vsel %vm29, %v22, 0
  %v37 = vsel %vm29, %v23, 0
  %v40 = vsel %vm29, %v24, 0
  %v43 = vsel %vm29, %v25, 0
  %v46 = vsel %vm29, %v26, 0
  %48 = vmatprep.subr.mxu0 0.0
  %49 = vmatpush1.xpose.msra.mxu0 0.0
  %50 = vmatprep.subr.mxu0 0.0
  %51 = vmatpush1.xpose.msra.mxu0 0.0
  %52 = vmatprep.subr.mxu0 0.0
  %53 = vmatpush1.xpose.msra.mxu0 0.0
  %54 = vmatprep.subr.mxu0 0.0
  %55 = vmatpush1.xpose.msra.mxu0 0.0
  %56 = vmatprep.subr.mxu0 0.0
  %57 = vmatpush1.xpose.msra.mxu0 0.0
  %58 = vmatprep.subr.mxu0 0.0
  %59 = vmatpush1.xpose.msra.mxu0 0.0
  %60 = vmatprep.subr.mxu0 0.0
  %61 = vmatpush1.xpose.msra.mxu0 0.0
  %62 = vmatprep.subr.mxu0 0.0
  %63 = vmatpush1.xpose.msra.mxu0 0.0
  %64 = vmatprep.subr.mxu0 0.0
  %65 = vmatpush1.xpose.msra.mxu0 0.0
  %66 = vmatprep.subr.mxu0 0.0
  %67 = vmatpush1.xpose.msra.mxu0 0.0
  %68 = vmatprep.subr.mxu0 0.0
  %69 = vmatpush1.xpose.msra.mxu0 0.0
  %70 = vmatprep.subr.mxu0 0.0
  %71 = vmatpush1.xpose.msra.mxu0 0.0
  %72 = vmatprep.subr.mxu0 0.0
  %73 = vmatpush1.xpose.msra.mxu0 %v46
  %74 = vmatprep.subr.mxu0 0.0
  %75 = vmatpush1.xpose.msra.mxu0 %v43
  %76 = vmatprep.subr.mxu0 0.0
  %77 = vmatpush1.xpose.msra.mxu0 %v40
  %78 = vmatprep.subr.mxu0 0.0
  %79 = vmatpush1.xpose.msra.mxu0 %v37
  %80 = vmatprep.subr.mxu0 0.0
  %81 = vmatpush2.xpose.msra.mxu0 0.0
  %82 = vmatprep.subr.mxu0 0.0
  %83 = vmatpush2.xpose.msra.mxu0 0.0
  %84 = vmatprep.subr.mxu0 0.0
  %85 = vmatpush2.xpose.msra.mxu0 0.0
  %86 = vmatprep.subr.mxu0 0.0
  %87 = vmatpush2.xpose.msra.mxu0 0.0
  %88 = vmatprep.subr.mxu0 0.0
  %89 = vmatpush2.xpose.msra.mxu0 0.0
  %90 = vmatprep.subr.mxu0 0.0
  %91 = vmatpush2.xpose.msra.mxu0 0.0
  %92 = vmatprep.subr.mxu0 0.0
  %93 = vmatpush2.xpose.msra.mxu0 0.0
  %94 = vmatprep.subr.mxu0 0.0
  %95 = vmatpush2.xpose.msra.mxu0 0.0
  %96 = vmatprep.subr.mxu0 0.0
  %97 = vmatpush2.xpose.msra.mxu0 0.0
  %98 = vmatprep.subr.mxu0 0.0
  %99 = vmatpush2.xpose.msra.mxu0 0.0
  %100 = vmatprep.subr.mxu0 0.0
  %101 = vmatpush2.xpose.msra.mxu0 0.0
  %102 = vmatprep.subr.mxu0 0.0
  %103 = vmatpush2.xpose.msra.mxu0 0.0
  %104 = vmatprep.subr.mxu0 0.0
  %105 = vmatpush2.xpose.msra.mxu0 0.0
  %106 = vmatprep.subr.mxu0 0.0
  %107 = vmatpush2.xpose.msra.mxu0 0.0
  %108 = vmatprep.subr.mxu0 0.0
  %109 = vmatpush2.xpose.msra.mxu0 0.0
  %110 = vmatprep.subr.mxu0 0.0
  %111 = vmatpush2.xpose.msra.mxu0 0.0
  %112 = vmatprep.mubr.f32.mxu0 0.0
  %113 = vmatmul.mubr.f32.gmra.mxu0 %v31
  %v114 = vpop.f32.mrf.mxu0
  %v115 = vadd.f32 0.0, %v114
  %v116 = vpop.f32.mrf.mxu0
  %117 = vmatprep.mubr.f32.mxu0 0.0
  %118 = vmatmul.mubr.f32.gmra.mxu0 %v34
  %v119 = vpop.f32.mrf.mxu0
  %v120 = vadd.f32 0.0, %v119
  %v121 = vpop.f32.mrf.mxu0
  %122 = vdwg.mxu0
  %v123 = vadd.f32 %v27, %v115
  %v124 = vadd.f32 %v28, %v120
  %vm125 = vcmask 261120
  %126 = vst.msk [vmem:[#allocation2] sm:$0xff] %vm125, %v123
  %127 = vst.msk [vmem:[#allocation2 + $0x8] sm:$0xff] %vm125, %v124
  // Predicated region
  $region18: #{reprogramming_layer_forward.7} parent=0 // pred_check
    %p128 = pneg %p14
  $region19: #{reprogramming_layer_forward.7} parent=0 // pred_check_branch
    %130 = sbr.rel (%p128) target = $region21
  $region20: #{reprogramming_layer_forward.7} parent=0 // pred_region
    %v131 = vld [vmem:[#allocation2] sm:$0xff]
    %v132 = vld [vmem:[#allocation2 + $0x8] sm:$0xff]
    %v133 = vld [vmem:[%s2] sm:$0x1]
    %v135 = vlaneseq
    %v136 = vshrl.u32 %v135, 7
    %v137 = vsub.s32 0, %v136
    %v138 = vrot.slane %v133, %v137
    %v140 = vadd.f32 %v131, %v138
    %v141 = vadd.f32 %v132, %v138
    %142 = vst.msk [vmem:[%s3] sm:$0xff] %vm125, %v140
    %143 = vst.msk [vmem:[%s3 + $0x8] sm:$0xff] %vm125, %v141
  $region21: #{reprogramming_layer_forward.7} parent=0 // pred_fallthru
    _
  // Predicated region
  $region22: #{reprogramming_layer_forward.7} parent=0 // pred_check
    _
  $region23: #{reprogramming_layer_forward.7} parent=0 // pred_check_branch
    %145 = sbr.rel (0) target = $region25
  $region24: #{reprogramming_layer_forward.7} parent=0 // pred_region
    _
  $region25: #{reprogramming_layer_forward.7} parent=0 // pred_fallthru
    _
  // Predicated region
  $region26: #{reprogramming_layer_forward.7} parent=0 // pred_check
    _
  $region27: #{reprogramming_layer_forward.7} parent=0 // pred_check_branch
    %147 = sbr.rel (0) target = $region29
  $region28: #{reprogramming_layer_forward.7} parent=0 // pred_region
    _
  $region29: #{reprogramming_layer_forward.7} parent=0 // pred_fallthru
    _

// kernel: reprogramming_layer_forward.6
$region0: #{reprogramming_layer_forward.6}
  #allocation0 [shape = 'u32[]', space=smem, size = 0x4, offset = 0x4, fixed_abs, tag = 'smem constant byte address 0x4 - core index']
  #allocation1 [shape = 'u32[144,128]{1,0:T(1,128)}', space=vmem, size = 0x12000, scoped, tag = 'internal scratch']
  #allocation2 [shape = 'f32[16,32]{1,0:T(8,128)}', space=vmem, size = 0x2000, scoped, tag = 'scratch operand']
  %s0 = inlined_call_operand.vmem [shape: f32[16,64], index: 0, kind: input, shape index: {}]
  %s1 = inlined_call_operand.hbm [shape: f32[32,64], index: 1, kind: input, shape index: {}]
  %s2 = inlined_call_operand.vmem [shape: f32[1,32], index: 2, kind: input, shape index: {}]
  %s3 = inlined_call_operand.vmem [shape: f32[16,32], index: 3, kind: output, shape index: {}]
  %s4 = sld [smem:[#allocation0]]
  $region34: #{reprogramming_layer_forward.6} parent=0
    _
  %s6 = ssub.s32 1, %s4
  %s7 = scalar_select 0, %s6, %s4
  $region1: #{reprogramming_layer_forward.6} parent=0
    #allocation3 [shape = 'u8[16384]{0}', space=vmem, size = 0x4000, scoped, tag = 'input window, operand 1, single buffered']
    #allocation4 [shape = 's32[1]{0}', space=sflag, size = 0x4, scoped, tag = 'scoped memory for reprogramming_layer_forward.6']
    %8 = vsyncpa [#allocation4], 0
    // Predicated region
    $region2: #{reprogramming_layer_forward.6} parent=1 // pred_check
      _
    $region3: #{reprogramming_layer_forward.6} parent=1 // pred_check_branch
      %10 = sbr.rel (0) target = $region5
    $region4: #{reprogramming_layer_forward.6} parent=1 // pred_region
      _
    $region5: #{reprogramming_layer_forward.6} parent=1 // pred_fallthru
      _
    // Predicated region
    $region6: #{reprogramming_layer_forward.6} parent=1 // pred_check
      _
    $region7: #{reprogramming_layer_forward.6} parent=1 // pred_check_branch
      %12 = sbr.rel (0) target = $region9
    $region8: #{reprogramming_layer_forward.6} parent=1 // pred_region
      %s14 = ssub.s32 512, 512
      %15 = vsyncadd [#allocation4], %s14
      %s16 = sshll.u32 [#allocation3], 4
      %s17 = int_to_ptr.vmem [resolvable:$true] %s16
      %22 = dma.hbm_to_vmem [thread:$0]  %s1, 512, %s17, [#allocation4], 128, 128, 8
    $region9: #{reprogramming_layer_forward.6} parent=1 // pred_fallthru
      _
    // Predicated region
    $region10: #{reprogramming_layer_forward.6} parent=1 // pred_check
      _
    $region11: #{reprogramming_layer_forward.6} parent=1 // pred_check_branch
      %24 = sbr.rel (0) target = $region13
    $region12: #{reprogramming_layer_forward.6} parent=1 // pred_region
      _
    $region13: #{reprogramming_layer_forward.6} parent=1 // pred_fallthru
      _
    // Predicated region
    $region14: #{reprogramming_layer_forward.6} parent=1 // pred_check
      _
    $region15: #{reprogramming_layer_forward.6} parent=1 // pred_check_branch
      %26 = sbr.rel (0) target = $region17
    $region16: #{reprogramming_layer_forward.6} parent=1 // pred_region
      %27 = dma.done [#allocation4], 512
    $region17: #{reprogramming_layer_forward.6} parent=1 // pred_fallthru
      _
    %p28 = scmp.eq.s32.totalorder 0, 0
    // Predicated region
    $region18: #{reprogramming_layer_forward.6} parent=1 // pred_check
      %p29 = pneg %p28
    $region19: #{reprogramming_layer_forward.6} parent=1 // pred_check_branch
      %31 = sbr.rel (%p29) target = $region21
    $region20: #{reprogramming_layer_forward.6} parent=1 // pred_region
      %vm32 = vcmask 261120
      %33 = vst.msk [vmem:[#allocation2] sm:$0xff] %vm32, 0.0
      %34 = vst.msk [vmem:[#allocation2 + $0x8] sm:$0xff] %vm32, 0.0
    $region21: #{reprogramming_layer_forward.6} parent=1 // pred_fallthru
      _
    %v35 = vld [vmem:[%s0] sm:$0xff]
    %v36 = vld [vmem:[%s0 + $0x8] sm:$0xff]
    %v37 = vld [vmem:[#allocation3] sm:$0xff]
    %v38 = vld [vmem:[#allocation3 + $0x8] sm:$0xff]
    %v39 = vld [vmem:[#allocation3 + $0x10] sm:$0xff]
    %v40 = vld [vmem:[#allocation3 + $0x18] sm:$0xff]
    %v41 = vld [vmem:[#allocation2] sm:$0xff]
    %v42 = vld [vmem:[#allocation2 + $0x8] sm:$0xff]
    %vm43 = vcmask 523264
    %v45 = vsel %vm43, %v35, 0
    %v48 = vsel %vm43, %v36, 0
    %v51 = vsel %vm43, %v37, 0
    %v54 = vsel %vm43, %v38, 0
    %v57 = vsel %vm43, %v39, 0
    %v60 = vsel %vm43, %v40, 0
    %62 = vmatprep.subr.mxu0 0.0
    %63 = vmatpush1.xpose.msra.mxu0 0.0
    %64 = vmatprep.subr.mxu0 0.0
    %65 = vmatpush1.xpose.msra.mxu0 0.0
    %66 = vmatprep.subr.mxu0 0.0
    %67 = vmatpush1.xpose.msra.mxu0 0.0
    %68 = vmatprep.subr.mxu0 0.0
    %69 = vmatpush1.xpose.msra.mxu0 0.0
    %70 = vmatprep.subr.mxu0 0.0
    %71 = vmatpush1.xpose.msra.mxu0 0.0
    %72 = vmatprep.subr.mxu0 0.0
    %73 = vmatpush1.xpose.msra.mxu0 0.0
    %74 = vmatprep.subr.mxu0 0.0
    %75 = vmatpush1.xpose.msra.mxu0 0.0
    %76 = vmatprep.subr.mxu0 0.0
    %77 = vmatpush1.xpose.msra.mxu0 0.0
    %78 = vmatprep.subr.mxu0 0.0
    %79 = vmatpush1.xpose.msra.mxu0 0.0
    %80 = vmatprep.subr.mxu0 0.0
    %81 = vmatpush1.xpose.msra.mxu0 0.0
    %82 = vmatprep.subr.mxu0 0.0
    %83 = vmatpush1.xpose.msra.mxu0 0.0
    %84 = vmatprep.subr.mxu0 0.0
    %85 = vmatpush1.xpose.msra.mxu0 0.0
    %86 = vmatprep.subr.mxu0 0.0
    %87 = vmatpush1.xpose.msra.mxu0 %v60
    %88 = vmatprep.subr.mxu0 0.0
    %89 = vmatpush1.xpose.msra.mxu0 %v57
    %90 = vmatprep.subr.mxu0 0.0
    %91 = vmatpush1.xpose.msra.mxu0 %v54
    %92 = vmatprep.subr.mxu0 0.0
    %93 = vmatpush1.xpose.msra.mxu0 %v51
    %94 = vmatprep.subr.mxu0 0.0
    %95 = vmatpush2.xpose.msra.mxu0 0.0
    %96 = vmatprep.subr.mxu0 0.0
    %97 = vmatpush2.xpose.msra.mxu0 0.0
    %98 = vmatprep.subr.mxu0 0.0
    %99 = vmatpush2.xpose.msra.mxu0 0.0
    %100 = vmatprep.subr.mxu0 0.0
    %101 = vmatpush2.xpose.msra.mxu0 0.0
    %102 = vmatprep.subr.mxu0 0.0
    %103 = vmatpush2.xpose.msra.mxu0 0.0
    %104 = vmatprep.subr.mxu0 0.0
    %105 = vmatpush2.xpose.msra.mxu0 0.0
    %106 = vmatprep.subr.mxu0 0.0
    %107 = vmatpush2.xpose.msra.mxu0 0.0
    %108 = vmatprep.subr.mxu0 0.0
    %109 = vmatpush2.xpose.msra.mxu0 0.0
    %110 = vmatprep.subr.mxu0 0.0
    %111 = vmatpush2.xpose.msra.mxu0 0.0
    %112 = vmatprep.subr.mxu0 0.0
    %113 = vmatpush2.xpose.msra.mxu0 0.0
    %114 = vmatprep.subr.mxu0 0.0
    %115 = vmatpush2.xpose.msra.mxu0 0.0
    %116 = vmatprep.subr.mxu0 0.0
    %117 = vmatpush2.xpose.msra.mxu0 0.0
    %118 = vmatprep.subr.mxu0 0.0
    %119 = vmatpush2.xpose.msra.mxu0 0.0
    %120 = vmatprep.subr.mxu0 0.0
    %121 = vmatpush2.xpose.msra.mxu0 0.0
    %122 = vmatprep.subr.mxu0 0.0
    %123 = vmatpush2.xpose.msra.mxu0 0.0
    %124 = vmatprep.subr.mxu0 0.0
    %125 = vmatpush2.xpose.msra.mxu0 0.0
    %126 = vmatprep.mubr.f32.mxu0 0.0
    %127 = vmatmul.mubr.f32.gmra.mxu0 %v45
    %v128 = vpop.f32.mrf.mxu0
    %v129 = vadd.f32 0.0, %v128
    %v130 = vpop.f32.mrf.mxu0
    %131 = vmatprep.mubr.f32.mxu0 0.0
    %132 = vmatmul.mubr.f32.gmra.mxu0 %v48
    %v133 = vpop.f32.mrf.mxu0
    %v134 = vadd.f32 0.0, %v133
    %v135 = vpop.f32.mrf.mxu0
    %136 = vdwg.mxu0
    %v137 = vadd.f32 %v41, %v129
    %v138 = vadd.f32 %v42, %v134
    %vm139 = vcmask 261120
    %140 = vst.msk [vmem:[#allocation2] sm:$0xff] %vm139, %v137
    %141 = vst.msk [vmem:[#allocation2 + $0x8] sm:$0xff] %vm139, %v138
    // Predicated region
    $region22: #{reprogramming_layer_forward.6} parent=1 // pred_check
      %p142 = pneg %p28
    $region23: #{reprogramming_layer_forward.6} parent=1 // pred_check_branch
      %144 = sbr.rel (%p142) target = $region25
    $region24: #{reprogramming_layer_forward.6} parent=1 // pred_region
      %v145 = vld [vmem:[#allocation2] sm:$0xff]
      %v146 = vld [vmem:[#allocation2 + $0x8] sm:$0xff]
      %v147 = vld [vmem:[%s2] sm:$0x1]
      %v149 = vlaneseq
      %v150 = vshrl.u32 %v149, 7
      %v151 = vsub.s32 0, %v150
      %v152 = vrot.slane %v147, %v151
      %v154 = vadd.f32 %v145, %v152
      %v155 = vadd.f32 %v146, %v152
      %156 = vst.msk [vmem:[%s3] sm:$0xff] %vm139, %v154
      %157 = vst.msk [vmem:[%s3 + $0x8] sm:$0xff] %vm139, %v155
    $region25: #{reprogramming_layer_forward.6} parent=1 // pred_fallthru
      _
    // Predicated region
    $region26: #{reprogramming_layer_forward.6} parent=1 // pred_check
      _
    $region27: #{reprogramming_layer_forward.6} parent=1 // pred_check_branch
      %159 = sbr.rel (0) target = $region29
    $region28: #{reprogramming_layer_forward.6} parent=1 // pred_region
      _
    $region29: #{reprogramming_layer_forward.6} parent=1 // pred_fallthru
      _
    // Predicated region
    $region30: #{reprogramming_layer_forward.6} parent=1 // pred_check
      _
    $region31: #{reprogramming_layer_forward.6} parent=1 // pred_check_branch
      %161 = sbr.rel (0) target = $region33
    $region32: #{reprogramming_layer_forward.6} parent=1 // pred_region
      _
    $region33: #{reprogramming_layer_forward.6} parent=1 // pred_fallthru
      _
    %162 = vsyncpa [#allocation4], 1

// kernel: reprogramming_layer_forward.5
$region0: #{reprogramming_layer_forward.5}
  #allocation0 [shape = 'u32[]', space=smem, size = 0x4, offset = 0x4, fixed_abs, tag = 'smem constant byte address 0x4 - core index']
  #allocation1 [shape = 'u32[144,128]{1,0:T(1,128)}', space=vmem, size = 0x12000, scoped, tag = 'internal scratch']
  #allocation2 [shape = 'f32[16,32]{1,0:T(8,128)}', space=vmem, size = 0x2000, scoped, tag = 'scratch operand']
  %s0 = inlined_call_operand.vmem [shape: f32[16,32], index: 0, kind: input, shape index: {}]
  %s1 = inlined_call_operand.vmem [shape: f32[32,32], index: 1, kind: input, shape index: {}]
  %s2 = inlined_call_operand.vmem [shape: f32[1,32], index: 2, kind: input, shape index: {}]
  %s3 = inlined_call_operand.vmem [shape: f32[16,32], index: 3, kind: output, shape index: {}]
  %s4 = sld [smem:[#allocation0]]
  $region30: #{reprogramming_layer_forward.5} parent=0
    _
  %s6 = ssub.s32 1, %s4
  %s7 = scalar_select 0, %s6, %s4
  // Predicated region
  $region2: #{reprogramming_layer_forward.5} parent=0 // pred_check
    _
  $region3: #{reprogramming_layer_forward.5} parent=0 // pred_check_branch
    %9 = sbr.rel (0) target = $region5
  $region4: #{reprogramming_layer_forward.5} parent=0 // pred_region
    _
  $region5: #{reprogramming_layer_forward.5} parent=0 // pred_fallthru
    _
  // Predicated region
  $region6: #{reprogramming_layer_forward.5} parent=0 // pred_check
    _
  $region7: #{reprogramming_layer_forward.5} parent=0 // pred_check_branch
    %11 = sbr.rel (0) target = $region9
  $region8: #{reprogramming_layer_forward.5} parent=0 // pred_region
    _
  $region9: #{reprogramming_layer_forward.5} parent=0 // pred_fallthru
    _
  // Predicated region
  $region10: #{reprogramming_layer_forward.5} parent=0 // pred_check
    _
  $region11: #{reprogramming_layer_forward.5} parent=0 // pred_check_branch
    %13 = sbr.rel (0) target = $region13
  $region12: #{reprogramming_layer_forward.5} parent=0 // pred_region
    _
  $region13: #{reprogramming_layer_forward.5} parent=0 // pred_fallthru
    _
  %p14 = scmp.eq.s32.totalorder 0, 0
  // Predicated region
  $region14: #{reprogramming_layer_forward.5} parent=0 // pred_check
    %p15 = pneg %p14
  $region15: #{reprogramming_layer_forward.5} parent=0 // pred_check_branch
    %17 = sbr.rel (%p15) target = $region17
  $region16: #{reprogramming_layer_forward.5} parent=0 // pred_region
    %vm18 = vcmask 261120
    %19 = vst.msk [vmem:[#allocation2] sm:$0xff] %vm18, 0.0
    %20 = vst.msk [vmem:[#allocation2 + $0x8] sm:$0xff] %vm18, 0.0
  $region17: #{reprogramming_layer_forward.5} parent=0 // pred_fallthru
    _
  %v21 = vld [vmem:[%s0] sm:$0xff]
  %v22 = vld [vmem:[%s0 + $0x8] sm:$0xff]
  %v23 = vld [vmem:[%s1] sm:$0xff]
  %v24 = vld [vmem:[%s1 + $0x8] sm:$0xff]
  %v25 = vld [vmem:[%s1 + $0x10] sm:$0xff]
  %v26 = vld [vmem:[%s1 + $0x18] sm:$0xff]
  %v27 = vld [vmem:[#allocation2] sm:$0xff]
  %v28 = vld [vmem:[#allocation2 + $0x8] sm:$0xff]
  %vm29 = vcmask 261120
  %v31 = vsel %vm29, %v21, 0
  %v34 = vsel %vm29, %v22, 0
  %v37 = vsel %vm29, %v23, 0
  %v40 = vsel %vm29, %v24, 0
  %v43 = vsel %vm29, %v25, 0
  %v46 = vsel %vm29, %v26, 0
  %48 = vmatprep.subr.mxu0 0.0
  %49 = vmatpush1.xpose.msra.mxu0 0.0
  %50 = vmatprep.subr.mxu0 0.0
  %51 = vmatpush1.xpose.msra.mxu0 0.0
  %52 = vmatprep.subr.mxu0 0.0
  %53 = vmatpush1.xpose.msra.mxu0 0.0
  %54 = vmatprep.subr.mxu0 0.0
  %55 = vmatpush1.xpose.msra.mxu0 0.0
  %56 = vmatprep.subr.mxu0 0.0
  %57 = vmatpush1.xpose.msra.mxu0 0.0
  %58 = vmatprep.subr.mxu0 0.0
  %59 = vmatpush1.xpose.msra.mxu0 0.0
  %60 = vmatprep.subr.mxu0 0.0
  %61 = vmatpush1.xpose.msra.mxu0 0.0
  %62 = vmatprep.subr.mxu0 0.0
  %63 = vmatpush1.xpose.msra.mxu0 0.0
  %64 = vmatprep.subr.mxu0 0.0
  %65 = vmatpush1.xpose.msra.mxu0 0.0
  %66 = vmatprep.subr.mxu0 0.0
  %67 = vmatpush1.xpose.msra.mxu0 0.0
  %68 = vmatprep.subr.mxu0 0.0
  %69 = vmatpush1.xpose.msra.mxu0 0.0
  %70 = vmatprep.subr.mxu0 0.0
  %71 = vmatpush1.xpose.msra.mxu0 0.0
  %72 = vmatprep.subr.mxu0 0.0
  %73 = vmatpush1.xpose.msra.mxu0 %v46
  %74 = vmatprep.subr.mxu0 0.0
  %75 = vmatpush1.xpose.msra.mxu0 %v43
  %76 = vmatprep.subr.mxu0 0.0
  %77 = vmatpush1.xpose.msra.mxu0 %v40
  %78 = vmatprep.subr.mxu0 0.0
  %79 = vmatpush1.xpose.msra.mxu0 %v37
  %80 = vmatprep.subr.mxu0 0.0
  %81 = vmatpush2.xpose.msra.mxu0 0.0
  %82 = vmatprep.subr.mxu0 0.0
  %83 = vmatpush2.xpose.msra.mxu0 0.0
  %84 = vmatprep.subr.mxu0 0.0
  %85 = vmatpush2.xpose.msra.mxu0 0.0
  %86 = vmatprep.subr.mxu0 0.0
  %87 = vmatpush2.xpose.msra.mxu0 0.0
  %88 = vmatprep.subr.mxu0 0.0
  %89 = vmatpush2.xpose.msra.mxu0 0.0
  %90 = vmatprep.subr.mxu0 0.0
  %91 = vmatpush2.xpose.msra.mxu0 0.0
  %92 = vmatprep.subr.mxu0 0.0
  %93 = vmatpush2.xpose.msra.mxu0 0.0
  %94 = vmatprep.subr.mxu0 0.0
  %95 = vmatpush2.xpose.msra.mxu0 0.0
  %96 = vmatprep.subr.mxu0 0.0
  %97 = vmatpush2.xpose.msra.mxu0 0.0
  %98 = vmatprep.subr.mxu0 0.0
  %99 = vmatpush2.xpose.msra.mxu0 0.0
  %100 = vmatprep.subr.mxu0 0.0
  %101 = vmatpush2.xpose.msra.mxu0 0.0
  %102 = vmatprep.subr.mxu0 0.0
  %103 = vmatpush2.xpose.msra.mxu0 0.0
  %104 = vmatprep.subr.mxu0 0.0
  %105 = vmatpush2.xpose.msra.mxu0 0.0
  %106 = vmatprep.subr.mxu0 0.0
  %107 = vmatpush2.xpose.msra.mxu0 0.0
  %108 = vmatprep.subr.mxu0 0.0
  %109 = vmatpush2.xpose.msra.mxu0 0.0
  %110 = vmatprep.subr.mxu0 0.0
  %111 = vmatpush2.xpose.msra.mxu0 0.0
  %112 = vmatprep.mubr.f32.mxu0 0.0
  %113 = vmatmul.mubr.f32.gmra.mxu0 %v31
  %v114 = vpop.f32.mrf.mxu0
  %v115 = vadd.f32 0.0, %v114
  %v116 = vpop.f32.mrf.mxu0
  %117 = vmatprep.mubr.f32.mxu0 0.0
  %118 = vmatmul.mubr.f32.gmra.mxu0 %v34
  %v119 = vpop.f32.mrf.mxu0
  %v120 = vadd.f32 0.0, %v119
  %v121 = vpop.f32.mrf.mxu0
  %122 = vdwg.mxu0
  %v123 = vadd.f32 %v27, %v115
  %v124 = vadd.f32 %v28, %v120
  %125 = vst.msk [vmem:[#allocation2] sm:$0xff] %vm29, %v123
  %126 = vst.msk [vmem:[#allocation2 + $0x8] sm:$0xff] %vm29, %v124
  // Predicated region
  $region18: #{reprogramming_layer_forward.5} parent=0 // pred_check
    %p127 = pneg %p14
  $region19: #{reprogramming_layer_forward.5} parent=0 // pred_check_branch
    %129 = sbr.rel (%p127) target = $region21
  $region20: #{reprogramming_layer_forward.5} parent=0 // pred_region
    %v130 = vld [vmem:[#allocation2] sm:$0xff]
    %v131 = vld [vmem:[#allocation2 + $0x8] sm:$0xff]
    %v132 = vld [vmem:[%s2] sm:$0x1]
    %v134 = vlaneseq
    %v135 = vshrl.u32 %v134, 7
    %v136 = vsub.s32 0, %v135
    %v137 = vrot.slane %v132, %v136
    %v139 = vadd.f32 %v130, %v137
    %v140 = vadd.f32 %v131, %v137
    %141 = vst.msk [vmem:[%s3] sm:$0xff] %vm29, %v139
    %142 = vst.msk [vmem:[%s3 + $0x8] sm:$0xff] %vm29, %v140
  $region21: #{reprogramming_layer_forward.5} parent=0 // pred_fallthru
    _
  // Predicated region
  $region22: #{reprogramming_layer_forward.5} parent=0 // pred_check
    _
  $region23: #{reprogramming_layer_forward.5} parent=0 // pred_check_branch
    %144 = sbr.rel (0) target = $region25
  $region24: #{reprogramming_layer_forward.5} parent=0 // pred_region
    _
  $region25: #{reprogramming_layer_forward.5} parent=0 // pred_fallthru
    _
  // Predicated region
  $region26: #{reprogramming_layer_forward.5} parent=0 // pred_check
    _
  $region27: #{reprogramming_layer_forward.5} parent=0 // pred_check_branch
    %146 = sbr.rel (0) target = $region29
  $region28: #{reprogramming_layer_forward.5} parent=0 // pred_region
    _
  $region29: #{reprogramming_layer_forward.5} parent=0 // pred_fallthru
    _

// kernel: reprogramming_layer_forward.8
$region0: #{reprogramming_layer_forward.8}
  #allocation0 [shape = 'u32[]', space=smem, size = 0x4, offset = 0x4, fixed_abs, tag = 'smem constant byte address 0x4 - core index']
  #allocation1 [shape = 'u32[144,128]{1,0:T(1,128)}', space=vmem, size = 0x12000, scoped, tag = 'internal scratch']
  #allocation2 [shape = 'f32[8,32]{1,0:T(8,128)}', space=vmem, size = 0x1000, scoped, tag = 'scratch operand']
  %s0 = inlined_call_operand.vmem [shape: f32[2,8,32], index: 0, kind: input, shape index: {}]
  %s1 = inlined_call_operand.vmem [shape: f32[16,32], index: 1, kind: input, shape index: {}]
  %s2 = inlined_call_operand.vmem [shape: f32[16,32], index: 2, kind: input, shape index: {}]
  %s3 = inlined_call_operand.vmem [shape: f32[2,8,32], index: 3, kind: output, shape index: {0}]
  %s4 = inlined_call_operand.hbm [shape: f32[2,4,8,16], index: 4, kind: output, shape index: {1}]
  %5 = xla_tuple %s3, %s4
  %s6 = sld [smem:[#allocation0]]
  $region53: #{reprogramming_layer_forward.8} parent=0
    _
  %s8 = ssub.s32 1, %s6
  %s9 = scalar_select 0, %s8, %s6
  $region1: #{reprogramming_layer_forward.8} parent=0
    #allocation3 [shape = 'u8[32768]{0}', space=vmem, size = 0x8000, scoped, tag = 'output window, operand 1']
    #allocation4 [shape = 's32[2]{0}', space=sflag, size = 0x8, scoped, tag = 'scoped memory for reprogramming_layer_forward.8']
    %10 = vsyncpa [#allocation4], 0
    %s11 = scalar_lea.sflag [#allocation4], 1
    %12 = vsyncpa %s11, 0
    loop: start=0, step=1, limit=4
    $region2: #{reprogramming_layer_forward.8} parent=1 // loop_pre_header
      _
    $region3: #{reprogramming_layer_forward.8} parent=1 // loop_header
      %s14 = sphi 0, %s18
      %p15 = scmp.ge.s32.totalorder %s14, 4
      %s21 = sphi 0, %s33
      %s22 = sphi 0, %s29
      %s23 = sphi 0, %s21
      %s24 = sphi 0, %s22
      %s25 = sphi 0, %s23
      %s26 = sphi 0, %s24
      %s38 = sphi 0, %s40
      %s41 = sphi 0, %s38
      %s42 = sphi 0, %s41
      %s58 = sphi 0, %s42
      %s62 = sphi 0, %s62
      %s64 = sphi 0, %s62
      %s65 = sphi 0, %s64
      %s79 = sphi 0, %s65
      %s83 = sphi 0, %s83
      %s85 = sphi 0, %s83
      %s86 = sphi 0, %s85
      %s100 = sphi 0, %s86
      %s108 = sphi 0, %s110
      %s111 = sphi 0, %s108
      %s112 = sphi 0, %s111
      %s128 = sphi 0, %s112
      %s136 = sphi 0, %s138
      %s139 = sphi 0, %s136
      %s140 = sphi 0, %s139
      %s156 = sphi 0, %s140
    $region4: #{reprogramming_layer_forward.8} parent=1 // loop_header_branch
      %17 = sbr.rel (%p15) target = $region8
    $region5: #{reprogramming_layer_forward.8} parent=1 // loop_body
      %s19 = ssub.s32 %s14, 1
      %s20 = ssub.s32 %s14, 2
      %s27 = sadd.s32 1, %s22
      %p28 = scmp.ge.s32.totalorder %s27, 1
      %s29 = scalar_select %p28, 0, %s27
      %s30 = sadd.s32 1, %s21
      %s31 = scalar_select %p28, %s30, %s21
      %p32 = scmp.ge.s32.totalorder %s31, 2
      %s33 = scalar_select %p32, 0, %s31
      %s34 = ssub.s32 %s21, %s33
      %s35 = ssub.s32 %s22, %s29
      %s36 = sor.u32 %s34, %s35
      %p37 = scmp.eq.s32.totalorder %s36, 0
      %s39 = sadd.s32 %s38, 1
      %s40 = scalar_select %p37, %s38, %s39
      %p43 = pneg %p37
      %p44 = scmp.eq.s32.totalorder %s14, 1
      %p45 = por %p43, %p44
      %p46 = scmp.ne.s32.totalorder %s38, %s41
      %p47 = scmp.eq.s32.totalorder %s14, 0
      %p48 = por %p46, %p47
      %p49 = scmp.ne.s32.totalorder %s38, %s41
      %p50 = scmp.eq.s32.totalorder %s19, 1
      %p51 = por %p49, %p50
      %p52 = scmp.ne.s32.totalorder %s41, %s42
      %p53 = scmp.eq.s32.totalorder %s19, 0
      %p54 = por %p52, %p53
      %p55 = scmp.ne.s32.totalorder %s41, %s42
      %p56 = scmp.eq.s32.totalorder %s20, 1
      %p57 = por %p55, %p56
      %p59 = scmp.ne.s32.totalorder %s42, %s58
      %p60 = scmp.eq.s32.totalorder %s20, 0
      %p61 = por %p59, %p60
      %s63 = sadd.s32 %s62, 1
      %p66 = scmp.eq.s32.totalorder %s14, 1
      %p67 = scmp.ne.s32.totalorder %s62, %s64
      %p68 = scmp.eq.s32.totalorder %s14, 0
      %p69 = por %p67, %p68
      %p70 = scmp.ne.s32.totalorder %s62, %s64
      %p71 = scmp.eq.s32.totalorder %s19, 1
      %p72 = por %p70, %p71
      %p73 = scmp.ne.s32.totalorder %s64, %s65
      %p74 = scmp.eq.s32.totalorder %s19, 0
      %p75 = por %p73, %p74
      %p76 = scmp.ne.s32.totalorder %s64, %s65
      %p77 = scmp.eq.s32.totalorder %s20, 1
      %p78 = por %p76, %p77
      %p80 = scmp.ne.s32.totalorder %s65, %s79
      %p81 = scmp.eq.s32.totalorder %s20, 0
      %p82 = por %p80, %p81
      %s84 = sadd.s32 %s83, 1
      %p87 = scmp.eq.s32.totalorder %s14, 1
      %p88 = scmp.ne.s32.totalorder %s83, %s85
      %p89 = scmp.eq.s32.totalorder %s14, 0
      %p90 = por %p88, %p89
      %p91 = scmp.ne.s32.totalorder %s83, %s85
      %p92 = scmp.eq.s32.totalorder %s19, 1
      %p93 = por %p91, %p92
      %p94 = scmp.ne.s32.totalorder %s85, %s86
      %p95 = scmp.eq.s32.totalorder %s19, 0
      %p96 = por %p94, %p95
      %p97 = scmp.ne.s32.totalorder %s85, %s86
      %p98 = scmp.eq.s32.totalorder %s20, 1
      %p99 = por %p97, %p98
      %p101 = scmp.ne.s32.totalorder %s86, %s100
      %p102 = scmp.eq.s32.totalorder %s20, 0
      %p103 = por %p101, %p102
      %s104 = ssub.s32 %s21, %s33
      %s105 = ssub.s32 %s22, %s29
      %s106 = sor.u32 %s104, %s105
      %p107 = scmp.eq.s32.totalorder %s106, 0
      %s109 = sadd.s32 %s108, 1
      %s110 = scalar_select %p107, %s108, %s109
      %p113 = pneg %p107
      %p114 = scmp.eq.s32.totalorder %s14, 1
      %p115 = por %p113, %p114
      %p116 = scmp.ne.s32.totalorder %s108, %s111
      %p117 = scmp.eq.s32.totalorder %s14, 0
      %p118 = por %p116, %p117
      %p119 = scmp.ne.s32.totalorder %s108, %s111
      %p120 = scmp.eq.s32.totalorder %s19, 1
      %p121 = por %p119, %p120
      %p122 = scmp.ne.s32.totalorder %s111, %s112
      %p123 = scmp.eq.s32.totalorder %s19, 0
      %p124 = por %p122, %p123
      %p125 = scmp.ne.s32.totalorder %s111, %s112
      %p126 = scmp.eq.s32.totalorder %s20, 1
      %p127 = por %p125, %p126
      %p129 = scmp.ne.s32.totalorder %s112, %s128
      %p130 = scmp.eq.s32.totalorder %s20, 0
      %p131 = por %p129, %p130
      %s132 = ssub.s32 %s21, %s33
      %s133 = ssub.s32 %s22, %s29
      %s134 = sor.u32 %s132, %s133
      %p135 = scmp.eq.s32.totalorder %s134, 0
      %s137 = sadd.s32 %s136, 1
      %s138 = scalar_select %p135, %s136, %s137
      %p141 = pneg %p135
      %p142 = scmp.eq.s32.totalorder %s14, 1
      %p143 = por %p141, %p142
      %p144 = scmp.ne.s32.totalorder %s136, %s139
      %p145 = scmp.eq.s32.totalorder %s14, 0
      %p146 = por %p144, %p145
      %p147 = scmp.ne.s32.totalorder %s136, %s139
      %p148 = scmp.eq.s32.totalorder %s19, 1
      %p149 = por %p147, %p148
      %p150 = scmp.ne.s32.totalorder %s139, %s140
      %p151 = scmp.eq.s32.totalorder %s19, 0
      %p152 = por %p150, %p151
      %p153 = scmp.ne.s32.totalorder %s139, %s140
      %p154 = scmp.eq.s32.totalorder %s20, 1
      %p155 = por %p153, %p154
      %p157 = scmp.ne.s32.totalorder %s140, %s156
      %p158 = scmp.eq.s32.totalorder %s20, 0
      %p159 = por %p157, %p158
      %p160 = scmp.le.s32.totalorder 1, %s14
      %p161 = scmp.lt.s32.totalorder %s14, 3
      %p162 = pnand %p160, %p161
      %p163 = pneg %p162
      // Predicated region
      $region9: #{reprogramming_layer_forward.8} parent=5 // pred_check
        _
      $region10: #{reprogramming_layer_forward.8} parent=5 // pred_check_branch
        %165 = sbr.rel (%p162) target = $region12
      $region11: #{reprogramming_layer_forward.8} parent=5 // pred_region
        %s166 = ssub.s32 %s14, 1
        // Predicated region
        $region13: #{reprogramming_layer_forward.8} parent=11 // pred_check
          %p167 = pneg %p75
        $region14: #{reprogramming_layer_forward.8} parent=11 // pred_check_branch
          %169 = sbr.rel (%p167) target = $region16
        $region15: #{reprogramming_layer_forward.8} parent=11 // pred_region
          _
        $region16: #{reprogramming_layer_forward.8} parent=11 // pred_fallthru
          _
        // Predicated region
        $region17: #{reprogramming_layer_forward.8} parent=11 // pred_check
          %p170 = pneg %p96
        $region18: #{reprogramming_layer_forward.8} parent=11 // pred_check_branch
          %172 = sbr.rel (%p170) target = $region20
        $region19: #{reprogramming_layer_forward.8} parent=11 // pred_region
          _
        $region20: #{reprogramming_layer_forward.8} parent=11 // pred_fallthru
          _
      $region12: #{reprogramming_layer_forward.8} parent=5 // pred_fallthru
        _
      %p173 = scmp.lt.s32.totalorder %s14, 2
      // Predicated region
      $region21: #{reprogramming_layer_forward.8} parent=5 // pred_check
        %p174 = pneg %p173
      $region22: #{reprogramming_layer_forward.8} parent=5 // pred_check_branch
        %176 = sbr.rel (%p174) target = $region24
      $region23: #{reprogramming_layer_forward.8} parent=5 // pred_region
        // Predicated region
        $region25: #{reprogramming_layer_forward.8} parent=23 // pred_check
          %p177 = pneg %p48
        $region26: #{reprogramming_layer_forward.8} parent=23 // pred_check_branch
          %179 = sbr.rel (%p177) target = $region28
        $region27: #{reprogramming_layer_forward.8} parent=23 // pred_region
          %p180 = scmp.lt.s32.totalorder %s21, 1
          %s181 = scalar_select %p180, %s21, 1
          %p182 = scmp.lt.s32.totalorder %s22, 0
          %s183 = scalar_select %p182, %s22, 0
          %s184 = sadd.s32 %s183, %s181
          %s185 = smul.addr %s184, 8
          %s186 = scalar_lea.vmem %s0, %s185
        $region28: #{reprogramming_layer_forward.8} parent=23 // pred_fallthru
          _
      $region24: #{reprogramming_layer_forward.8} parent=5 // pred_fallthru
        _
      %p187 = scmp.le.s32.totalorder 1, %s14
      %p188 = scmp.lt.s32.totalorder %s14, 3
      %p189 = pnand %p187, %p188
      %p190 = pneg %p189
      // Predicated region
      $region29: #{reprogramming_layer_forward.8} parent=5 // pred_check
        _
      $region30: #{reprogramming_layer_forward.8} parent=5 // pred_check_branch
        %192 = sbr.rel (%p189) target = $region32
      $region31: #{reprogramming_layer_forward.8} parent=5 // pred_region
        %s193 = ssub.s32 %s14, 1
        %p194 = scmp.lt.s32.totalorder %s23, 1
        %s195 = scalar_select %p194, %s23, 1
        %p196 = scmp.lt.s32.totalorder %s24, 0
        %s197 = scalar_select %p196, %s24, 0
        %s198 = sadd.s32 %s197, %s195
        %s199 = smul.addr %s198, 8
        %s200 = scalar_lea.vmem %s0, %s199
        %p201 = pneg %p54
        %p202 = pneg %p51
        %p203 = pneg %p75
        %p204 = pneg %p72
        %p205 = pneg %p96
        %p206 = pneg %p93
        %p207 = pneg %p124
        %p208 = pneg %p121
        %p209 = scmp.lt.s32.totalorder %s23, 1
        %s210 = scalar_select %p209, %s23, 1
        %p211 = scmp.lt.s32.totalorder %s24, 0
        %s212 = scalar_select %p211, %s24, 0
        %s213 = sadd.s32 %s212, %s210
        %s214 = smul.addr %s213, 8
        %s215 = scalar_lea.vmem %s3, %s214
        %p216 = pneg %p152
        %p217 = pneg %p149
        %s218 = sand.u32 %s139, 1
        %s219 = scalar_lea.sflag [#allocation4], %s218
        %s220 = sand.u32 %s139, 1
        %s221 = smul.addr %s220, 32
        %s222 = scalar_lea.vmem [#allocation3], %s221
        %p223 = scmp.lt.s32.totalorder %s23, 1
        %s224 = scalar_select %p223, %s23, 1
        %p225 = scmp.lt.s32.totalorder %s24, 0
        %s226 = scalar_select %p225, %s24, 0
        %s227 = sadd.s32 %s226, %s224
        %s228 = smul.addr %s227, 8
        %s229 = scalar_lea.vmem %s0, %s228
        %p230 = scmp.lt.s32.totalorder %s23, 1
        %s231 = scalar_select %p230, %s23, 1
        %p232 = scmp.lt.s32.totalorder %s24, 0
        %s233 = scalar_select %p232, %s24, 0
        %s234 = sadd.s32 %s233, %s231
        %s235 = smul.addr %s234, 8
        %s236 = scalar_lea.vmem %s3, %s235
        %v237 = vld [vmem:[%s229] sm:$0xff]
        %v238 = vld [vmem:[%s1] sm:$0xff]
        %v239 = vld [vmem:[%s1 + $0x8] sm:$0xff]
        %v240 = vld [vmem:[%s2] sm:$0xff]
        %v241 = vld [vmem:[%s2 + $0x8] sm:$0xff]
        %vm242 = vcmask 64512
        %v244 = vsel %vm242, %v237, 0
        %v247 = vsel %vm242, %v238, 0
        %v250 = vsel %vm242, %v239, 0
        %252 = vmatprep.subr.mxu0 0.0
        %253 = vmatpush1.xpose.msra.mxu0 0.0
        %254 = vmatprep.subr.mxu0 0.0
        %255 = vmatpush1.xpose.msra.mxu0 0.0
        %256 = vmatprep.subr.mxu0 0.0
        %257 = vmatpush1.xpose.msra.mxu0 0.0
        %258 = vmatprep.subr.mxu0 0.0
        %259 = vmatpush1.xpose.msra.mxu0 0.0
        %260 = vmatprep.subr.mxu0 0.0
        %261 = vmatpush1.xpose.msra.mxu0 0.0
        %262 = vmatprep.subr.mxu0 0.0
        %263 = vmatpush1.xpose.msra.mxu0 0.0
        %264 = vmatprep.subr.mxu0 0.0
        %265 = vmatpush1.xpose.msra.mxu0 0.0
        %266 = vmatprep.subr.mxu0 0.0
        %267 = vmatpush1.xpose.msra.mxu0 0.0
        %268 = vmatprep.subr.mxu0 0.0
        %269 = vmatpush1.xpose.msra.mxu0 0.0
        %270 = vmatprep.subr.mxu0 0.0
        %271 = vmatpush1.xpose.msra.mxu0 0.0
        %272 = vmatprep.subr.mxu0 0.0
        %273 = vmatpush1.xpose.msra.mxu0 0.0
        %274 = vmatprep.subr.mxu0 0.0
        %275 = vmatpush1.xpose.msra.mxu0 0.0
        %276 = vmatprep.subr.mxu0 0.0
        %277 = vmatpush1.xpose.msra.mxu0 0.0
        %278 = vmatprep.subr.mxu0 0.0
        %279 = vmatpush1.xpose.msra.mxu0 0.0
        %280 = vmatprep.subr.mxu0 0.0
        %281 = vmatpush1.xpose.msra.mxu0 %v250
        %282 = vmatprep.subr.mxu0 0.0
        %283 = vmatpush1.xpose.msra.mxu0 %v247
        %284 = vmatprep.subr.mxu0 0.0
        %285 = vmatpush2.xpose.msra.mxu0 0.0
        %286 = vmatprep.subr.mxu0 0.0
        %287 = vmatpush2.xpose.msra.mxu0 0.0
        %288 = vmatprep.subr.mxu0 0.0
        %289 = vmatpush2.xpose.msra.mxu0 0.0
        %290 = vmatprep.subr.mxu0 0.0
        %291 = vmatpush2.xpose.msra.mxu0 0.0
        %292 = vmatprep.subr.mxu0 0.0
        %293 = vmatpush2.xpose.msra.mxu0 0.0
        %294 = vmatprep.subr.mxu0 0.0
        %295 = vmatpush2.xpose.msra.mxu0 0.0
        %296 = vmatprep.subr.mxu0 0.0
        %297 = vmatpush2.xpose.msra.mxu0 0.0
        %298 = vmatprep.subr.mxu0 0.0
        %299 = vmatpush2.xpose.msra.mxu0 0.0
        %300 = vmatprep.subr.mxu0 0.0
        %301 = vmatpush2.xpose.msra.mxu0 0.0
        %302 = vmatprep.subr.mxu0 0.0
        %303 = vmatpush2.xpose.msra.mxu0 0.0
        %304 = vmatprep.subr.mxu0 0.0
        %305 = vmatpush2.xpose.msra.mxu0 0.0
        %306 = vmatprep.subr.mxu0 0.0
        %307 = vmatpush2.xpose.msra.mxu0 0.0
        %308 = vmatprep.subr.mxu0 0.0
        %309 = vmatpush2.xpose.msra.mxu0 0.0
        %310 = vmatprep.subr.mxu0 0.0
        %311 = vmatpush2.xpose.msra.mxu0 0.0
        %312 = vmatprep.subr.mxu0 0.0
        %313 = vmatpush2.xpose.msra.mxu0 0.0
        %314 = vmatprep.subr.mxu0 0.0
        %315 = vmatpush2.xpose.msra.mxu0 0.0
        %316 = vmatprep.mubr.f32.mxu0 0.0
        %317 = vmatmul.mubr.f32.gmra.mxu0 %v244
        %v318 = vpop.f32.mrf.mxu0
        %v319 = vadd.f32 0.0, %v318
        %v320 = vpop.f32.mrf.mxu0
        %321 = vdwg.mxu0
        %v322 = vmul.f32 %v319, 0.35355338
        %vm323 = vcmask 130048
        %v324 = vsel %vm323, %v322, -inf
        %325 = vmax.xlane.f32.xlu0 %v324
        %v326 = vpop.xlane.xlu0 %325
        %v327 = vsub.f32 %v322, %v326
        %v328 = vmul.f32 %v327, 1.442695
        %v329 = vpow.pop %v328
        %v330 = vsel %vm323, %v329, 0.0
        %331 = vadd.xlane.f32.xlu0 %v330
        %v332 = vpop.xlane.xlu0 %331
        %v333 = vrcp.pop %v332
        %v334 = vmul.f32 1.0, %v333
        %v335 = vmul.f32 %v329, %v334
        %336 = vst.msk [vmem:[%s222] sm:$0xff] %vm323, %v335
        %v338 = vsel %vm323, %v335, 0
        %340 = vmatprep.subr.mxu0 0.0
        %341 = vmatpush1.msra.mxu0 0.0
        %342 = vmatprep.subr.mxu0 0.0
        %343 = vmatpush1.msra.mxu0 0.0
        %344 = vmatprep.subr.mxu0 0.0
        %345 = vmatpush1.msra.mxu0 0.0
        %346 = vmatprep.subr.mxu0 0.0
        %347 = vmatpush1.msra.mxu0 0.0
        %348 = vmatprep.subr.mxu0 0.0
        %349 = vmatpush1.msra.mxu0 0.0
        %350 = vmatprep.subr.mxu0 0.0
        %351 = vmatpush1.msra.mxu0 0.0
        %352 = vmatprep.subr.mxu0 0.0
        %353 = vmatpush1.msra.mxu0 0.0
        %354 = vmatprep.subr.mxu0 0.0
        %355 = vmatpush1.msra.mxu0 0.0
        %356 = vmatprep.subr.mxu0 0.0
        %357 = vmatpush1.msra.mxu0 0.0
        %358 = vmatprep.subr.mxu0 0.0
        %359 = vmatpush1.msra.mxu0 0.0
        %360 = vmatprep.subr.mxu0 0.0
        %361 = vmatpush1.msra.mxu0 0.0
        %362 = vmatprep.subr.mxu0 0.0
        %363 = vmatpush1.msra.mxu0 0.0
        %364 = vmatprep.subr.mxu0 0.0
        %365 = vmatpush1.msra.mxu0 0.0
        %366 = vmatprep.subr.mxu0 0.0
        %367 = vmatpush1.msra.mxu0 0.0
        %368 = vmatprep.subr.mxu0 0.0
        %369 = vmatpush1.msra.mxu0 %v241
        %370 = vmatprep.subr.mxu0 0.0
        %371 = vmatpush1.msra.mxu0 %v240
        %372 = vmatprep.subr.mxu0 0.0
        %373 = vmatpush2.msra.mxu0 0.0
        %374 = vmatprep.subr.mxu0 0.0
        %375 = vmatpush2.msra.mxu0 0.0
        %376 = vmatprep.subr.mxu0 0.0
        %377 = vmatpush2.msra.mxu0 0.0
        %378 = vmatprep.subr.mxu0 0.0
        %379 = vmatpush2.msra.mxu0 0.0
        %380 = vmatprep.subr.mxu0 0.0
        %381 = vmatpush2.msra.mxu0 0.0
        %382 = vmatprep.subr.mxu0 0.0
        %383 = vmatpush2.msra.mxu0 0.0
        %384 = vmatprep.subr.mxu0 0.0
        %385 = vmatpush2.msra.mxu0 0.0
        %386 = vmatprep.subr.mxu0 0.0
        %387 = vmatpush2.msra.mxu0 0.0
        %388 = vmatprep.subr.mxu0 0.0
        %389 = vmatpush2.msra.mxu0 0.0
        %390 = vmatprep.subr.mxu0 0.0
        %391 = vmatpush2.msra.mxu0 0.0
        %392 = vmatprep.subr.mxu0 0.0
        %393 = vmatpush2.msra.mxu0 0.0
        %394 = vmatprep.subr.mxu0 0.0
        %395 = vmatpush2.msra.mxu0 0.0
        %396 = vmatprep.subr.mxu0 0.0
        %397 = vmatpush2.msra.mxu0 0.0
        %398 = vmatprep.subr.mxu0 0.0
        %399 = vmatpush2.msra.mxu0 0.0
        %400 = vmatprep.subr.mxu0 0.0
        %401 = vmatpush2.msra.mxu0 0.0
        %402 = vmatprep.subr.mxu0 0.0
        %403 = vmatpush2.msra.mxu0 0.0
        %404 = vmatprep.mubr.f32.mxu0 0.0
        %405 = vmatmul.mubr.f32.gmra.mxu0 %v338
        %v406 = vpop.f32.mrf.mxu0
        %v407 = vadd.f32 0.0, %v406
        %v408 = vpop.f32.mrf.mxu0
        %409 = vdwg.mxu0
        %410 = vst.msk [vmem:[#allocation2] sm:$0xff] %vm242, %v407
        %v411 = vld [vmem:[%s229] sm:$0xff]
        %v412 = vld [vmem:[%s1] sm:$0xff]
        %v413 = vld [vmem:[%s1 + $0x8] sm:$0xff]
        %v414 = vld [vmem:[%s2] sm:$0xff]
        %v415 = vld [vmem:[%s2 + $0x8] sm:$0xff]
        %417 = vrot.lane.b32.xlu0 %v411, 120
        %v418 = vpop.permute.xlu0 %417
        %421 = vrot.lane.b32.xlu0 %v412, 120
        %v422 = vpop.permute.xlu0 %421
        %423 = vrot.lane.b32.xlu0 %v413, 120
        %v424 = vpop.permute.xlu0 %423
        %v425 = vsel %vm242, %v418, 0
        %v427 = vsel %vm242, %v422, 0
        %v429 = vsel %vm242, %v424, 0
        %431 = vmatprep.subr.mxu0 0.0
        %432 = vmatpush1.xpose.msra.mxu0 0.0
        %433 = vmatprep.subr.mxu0 0.0
        %434 = vmatpush1.xpose.msra.mxu0 0.0
        %435 = vmatprep.subr.mxu0 0.0
        %436 = vmatpush1.xpose.msra.mxu0 0.0
        %437 = vmatprep.subr.mxu0 0.0
        %438 = vmatpush1.xpose.msra.mxu0 0.0
        %439 = vmatprep.subr.mxu0 0.0
        %440 = vmatpush1.xpose.msra.mxu0 0.0
        %441 = vmatprep.subr.mxu0 0.0
        %442 = vmatpush1.xpose.msra.mxu0 0.0
        %443 = vmatprep.subr.mxu0 0.0
        %444 = vmatpush1.xpose.msra.mxu0 0.0
        %445 = vmatprep.subr.mxu0 0.0
        %446 = vmatpush1.xpose.msra.mxu0 0.0
        %447 = vmatprep.subr.mxu0 0.0
        %448 = vmatpush1.xpose.msra.mxu0 0.0
        %449 = vmatprep.subr.mxu0 0.0
        %450 = vmatpush1.xpose.msra.mxu0 0.0
        %451 = vmatprep.subr.mxu0 0.0
        %452 = vmatpush1.xpose.msra.mxu0 0.0
        %453 = vmatprep.subr.mxu0 0.0
        %454 = vmatpush1.xpose.msra.mxu0 0.0
        %455 = vmatprep.subr.mxu0 0.0
        %456 = vmatpush1.xpose.msra.mxu0 0.0
        %457 = vmatprep.subr.mxu0 0.0
        %458 = vmatpush1.xpose.msra.mxu0 0.0
        %459 = vmatprep.subr.mxu0 0.0
        %460 = vmatpush1.xpose.msra.mxu0 %v429
        %461 = vmatprep.subr.mxu0 0.0
        %462 = vmatpush1.xpose.msra.mxu0 %v427
        %463 = vmatprep.subr.mxu0 0.0
        %464 = vmatpush2.xpose.msra.mxu0 0.0
        %465 = vmatprep.subr.mxu0 0.0
        %466 = vmatpush2.xpose.msra.mxu0 0.0
        %467 = vmatprep.subr.mxu0 0.0
        %468 = vmatpush2.xpose.msra.mxu0 0.0
        %469 = vmatprep.subr.mxu0 0.0
        %470 = vmatpush2.xpose.msra.mxu0 0.0
        %471 = vmatprep.subr.mxu0 0.0
        %472 = vmatpush2.xpose.msra.mxu0 0.0
        %473 = vmatprep.subr.mxu0 0.0
        %474 = vmatpush2.xpose.msra.mxu0 0.0
        %475 = vmatprep.subr.mxu0 0.0
        %476 = vmatpush2.xpose.msra.mxu0 0.0
        %477 = vmatprep.subr.mxu0 0.0
        %478 = vmatpush2.xpose.msra.mxu0 0.0
        %479 = vmatprep.subr.mxu0 0.0
        %480 = vmatpush2.xpose.msra.mxu0 0.0
        %481 = vmatprep.subr.mxu0 0.0
        %482 = vmatpush2.xpose.msra.mxu0 0.0
        %483 = vmatprep.subr.mxu0 0.0
        %484 = vmatpush2.xpose.msra.mxu0 0.0
        %485 = vmatprep.subr.mxu0 0.0
        %486 = vmatpush2.xpose.msra.mxu0 0.0
        %487 = vmatprep.subr.mxu0 0.0
        %488 = vmatpush2.xpose.msra.mxu0 0.0
        %489 = vmatprep.subr.mxu0 0.0
        %490 = vmatpush2.xpose.msra.mxu0 0.0
        %491 = vmatprep.subr.mxu0 0.0
        %492 = vmatpush2.xpose.msra.mxu0 0.0
        %493 = vmatprep.subr.mxu0 0.0
        %494 = vmatpush2.xpose.msra.mxu0 0.0
        %495 = vmatprep.mubr.f32.mxu0 0.0
        %496 = vmatmul.mubr.f32.gmra.mxu0 %v425
        %v497 = vpop.f32.mrf.mxu0
        %v498 = vadd.f32 0.0, %v497
        %v499 = vpop.f32.mrf.mxu0
        %500 = vdwg.mxu0
        %v501 = vmul.f32 %v498, 0.35355338
        %v502 = vsel %vm323, %v501, -inf
        %503 = vmax.xlane.f32.xlu0 %v502
        %v504 = vpop.xlane.xlu0 %503
        %v505 = vsub.f32 %v501, %v504
        %v506 = vmul.f32 %v505, 1.442695
        %v507 = vpow.pop %v506
        %v508 = vsel %vm323, %v507, 0.0
        %509 = vadd.xlane.f32.xlu0 %v508
        %v510 = vpop.xlane.xlu0 %509
        %v511 = vrcp.pop %v510
        %v512 = vmul.f32 1.0, %v511
        %v513 = vmul.f32 %v507, %v512
        %s514 = scalar_lea.vmem %s222, 8 [#allocation3]
        %515 = vst.msk [vmem:[%s514] sm:$0xff] %vm323, %v513
        %518 = vrot.lane.b32.xlu0 %v414, 120
        %v519 = vpop.permute.xlu0 %518
        %520 = vrot.lane.b32.xlu0 %v415, 120
        %v521 = vpop.permute.xlu0 %520
        %v525 = vsel %vm323, %v513, 0
        %527 = vmatprep.subr.mxu0 0.0
        %528 = vmatpush1.msra.mxu0 0.0
        %529 = vmatprep.subr.mxu0 0.0
        %530 = vmatpush1.msra.mxu0 0.0
        %531 = vmatprep.subr.mxu0 0.0
        %532 = vmatpush1.msra.mxu0 0.0
        %533 = vmatprep.subr.mxu0 0.0
        %534 = vmatpush1.msra.mxu0 0.0
        %535 = vmatprep.subr.mxu0 0.0
        %536 = vmatpush1.msra.mxu0 0.0
        %537 = vmatprep.subr.mxu0 0.0
        %538 = vmatpush1.msra.mxu0 0.0
        %539 = vmatprep.subr.mxu0 0.0
        %540 = vmatpush1.msra.mxu0 0.0
        %541 = vmatprep.subr.mxu0 0.0
        %542 = vmatpush1.msra.mxu0 0.0
        %543 = vmatprep.subr.mxu0 0.0
        %544 = vmatpush1.msra.mxu0 0.0
        %545 = vmatprep.subr.mxu0 0.0
        %546 = vmatpush1.msra.mxu0 0.0
        %547 = vmatprep.subr.mxu0 0.0
        %548 = vmatpush1.msra.mxu0 0.0
        %549 = vmatprep.subr.mxu0 0.0
        %550 = vmatpush1.msra.mxu0 0.0
        %551 = vmatprep.subr.mxu0 0.0
        %552 = vmatpush1.msra.mxu0 0.0
        %553 = vmatprep.subr.mxu0 0.0
        %554 = vmatpush1.msra.mxu0 0.0
        %555 = vmatprep.subr.mxu0 0.0
        %556 = vmatpush1.msra.mxu0 %v521
        %557 = vmatprep.subr.mxu0 0.0
        %558 = vmatpush1.msra.mxu0 %v519
        %559 = vmatprep.subr.mxu0 0.0
        %560 = vmatpush2.msra.mxu0 0.0
        %561 = vmatprep.subr.mxu0 0.0
        %562 = vmatpush2.msra.mxu0 0.0
        %563 = vmatprep.subr.mxu0 0.0
        %564 = vmatpush2.msra.mxu0 0.0
        %565 = vmatprep.subr.mxu0 0.0
        %566 = vmatpush2.msra.mxu0 0.0
        %567 = vmatprep.subr.mxu0 0.0
        %568 = vmatpush2.msra.mxu0 0.0
        %569 = vmatprep.subr.mxu0 0.0
        %570 = vmatpush2.msra.mxu0 0.0
        %571 = vmatprep.subr.mxu0 0.0
        %572 = vmatpush2.msra.mxu0 0.0
        %573 = vmatprep.subr.mxu0 0.0
        %574 = vmatpush2.msra.mxu0 0.0
        %575 = vmatprep.subr.mxu0 0.0
        %576 = vmatpush2.msra.mxu0 0.0
        %577 = vmatprep.subr.mxu0 0.0
        %578 = vmatpush2.msra.mxu0 0.0
        %579 = vmatprep.subr.mxu0 0.0
        %580 = vmatpush2.msra.mxu0 0.0
        %581 = vmatprep.subr.mxu0 0.0
        %582 = vmatpush2.msra.mxu0 0.0
        %583 = vmatprep.subr.mxu0 0.0
        %584 = vmatpush2.msra.mxu0 0.0
        %585 = vmatprep.subr.mxu0 0.0
        %586 = vmatpush2.msra.mxu0 0.0
        %587 = vmatprep.subr.mxu0 0.0
        %588 = vmatpush2.msra.mxu0 0.0
        %589 = vmatprep.subr.mxu0 0.0
        %590 = vmatpush2.msra.mxu0 0.0
        %591 = vmatprep.mubr.f32.mxu0 0.0
        %592 = vmatmul.mubr.f32.gmra.mxu0 %v525
        %v593 = vpop.f32.mrf.mxu0
        %v594 = vadd.f32 0.0, %v593
        %v595 = vpop.f32.mrf.mxu0
        %596 = vdwg.mxu0
        %598 = vrot.lane.b32.xlu0 %v594, 8
        %v599 = vpop.permute.xlu0 %598
        %vm601 = vcmask 130112
        %602 = vst.msk [vmem:[#allocation2] sm:$0xff] %vm601, %v599
        %v603 = vld [vmem:[%s229] sm:$0xff]
        %v604 = vld [vmem:[%s1] sm:$0xff]
        %v605 = vld [vmem:[%s1 + $0x8] sm:$0xff]
        %v606 = vld [vmem:[%s2] sm:$0xff]
        %v607 = vld [vmem:[%s2 + $0x8] sm:$0xff]
        %609 = vrot.lane.b32.xlu0 %v603, 112
        %v610 = vpop.permute.xlu0 %609
        %613 = vrot.lane.b32.xlu0 %v604, 112
        %v614 = vpop.permute.xlu0 %613
        %615 = vrot.lane.b32.xlu0 %v605, 112
        %v616 = vpop.permute.xlu0 %615
        %v617 = vsel %vm242, %v610, 0
        %v619 = vsel %vm242, %v614, 0
        %v621 = vsel %vm242, %v616, 0
        %623 = vmatprep.subr.mxu0 0.0
        %624 = vmatpush1.xpose.msra.mxu0 0.0
        %625 = vmatprep.subr.mxu0 0.0
        %626 = vmatpush1.xpose.msra.mxu0 0.0
        %627 = vmatprep.subr.mxu0 0.0
        %628 = vmatpush1.xpose.msra.mxu0 0.0
        %629 = vmatprep.subr.mxu0 0.0
        %630 = vmatpush1.xpose.msra.mxu0 0.0
        %631 = vmatprep.subr.mxu0 0.0
        %632 = vmatpush1.xpose.msra.mxu0 0.0
        %633 = vmatprep.subr.mxu0 0.0
        %634 = vmatpush1.xpose.msra.mxu0 0.0
        %635 = vmatprep.subr.mxu0 0.0
        %636 = vmatpush1.xpose.msra.mxu0 0.0
        %637 = vmatprep.subr.mxu0 0.0
        %638 = vmatpush1.xpose.msra.mxu0 0.0
        %639 = vmatprep.subr.mxu0 0.0
        %640 = vmatpush1.xpose.msra.mxu0 0.0
        %641 = vmatprep.subr.mxu0 0.0
        %642 = vmatpush1.xpose.msra.mxu0 0.0
        %643 = vmatprep.subr.mxu0 0.0
        %644 = vmatpush1.xpose.msra.mxu0 0.0
        %645 = vmatprep.subr.mxu0 0.0
        %646 = vmatpush1.xpose.msra.mxu0 0.0
        %647 = vmatprep.subr.mxu0 0.0
        %648 = vmatpush1.xpose.msra.mxu0 0.0
        %649 = vmatprep.subr.mxu0 0.0
        %650 = vmatpush1.xpose.msra.mxu0 0.0
        %651 = vmatprep.subr.mxu0 0.0
        %652 = vmatpush1.xpose.msra.mxu0 %v621
        %653 = vmatprep.subr.mxu0 0.0
        %654 = vmatpush1.xpose.msra.mxu0 %v619
        %655 = vmatprep.subr.mxu0 0.0
        %656 = vmatpush2.xpose.msra.mxu0 0.0
        %657 = vmatprep.subr.mxu0 0.0
        %658 = vmatpush2.xpose.msra.mxu0 0.0
        %659 = vmatprep.subr.mxu0 0.0
        %660 = vmatpush2.xpose.msra.mxu0 0.0
        %661 = vmatprep.subr.mxu0 0.0
        %662 = vmatpush2.xpose.msra.mxu0 0.0
        %663 = vmatprep.subr.mxu0 0.0
        %664 = vmatpush2.xpose.msra.mxu0 0.0
        %665 = vmatprep.subr.mxu0 0.0
        %666 = vmatpush2.xpose.msra.mxu0 0.0
        %667 = vmatprep.subr.mxu0 0.0
        %668 = vmatpush2.xpose.msra.mxu0 0.0
        %669 = vmatprep.subr.mxu0 0.0
        %670 = vmatpush2.xpose.msra.mxu0 0.0
        %671 = vmatprep.subr.mxu0 0.0
        %672 = vmatpush2.xpose.msra.mxu0 0.0
        %673 = vmatprep.subr.mxu0 0.0
        %674 = vmatpush2.xpose.msra.mxu0 0.0
        %675 = vmatprep.subr.mxu0 0.0
        %676 = vmatpush2.xpose.msra.mxu0 0.0
        %677 = vmatprep.subr.mxu0 0.0
        %678 = vmatpush2.xpose.msra.mxu0 0.0
        %679 = vmatprep.subr.mxu0 0.0
        %680 = vmatpush2.xpose.msra.mxu0 0.0
        %681 = vmatprep.subr.mxu0 0.0
        %682 = vmatpush2.xpose.msra.mxu0 0.0
        %683 = vmatprep.subr.mxu0 0.0
        %684 = vmatpush2.xpose.msra.mxu0 0.0
        %685 = vmatprep.subr.mxu0 0.0
        %686 = vmatpush2.xpose.msra.mxu0 0.0
        %687 = vmatprep.mubr.f32.mxu0 0.0
        %688 = vmatmul.mubr.f32.gmra.mxu0 %v617
        %v689 = vpop.f32.mrf.mxu0
        %v690 = vadd.f32 0.0, %v689
        %v691 = vpop.f32.mrf.mxu0
        %692 = vdwg.mxu0
        %v693 = vmul.f32 %v690, 0.35355338
        %v694 = vsel %vm323, %v693, -inf
        %695 = vmax.xlane.f32.xlu0 %v694
        %v696 = vpop.xlane.xlu0 %695
        %v697 = vsub.f32 %v693, %v696
        %v698 = vmul.f32 %v697, 1.442695
        %v699 = vpow.pop %v698
        %v700 = vsel %vm323, %v699, 0.0
        %701 = vadd.xlane.f32.xlu0 %v700
        %v702 = vpop.xlane.xlu0 %701
        %v703 = vrcp.pop %v702
        %v704 = vmul.f32 1.0, %v703
        %v705 = vmul.f32 %v699, %v704
        %s706 = scalar_lea.vmem %s222, 16 [#allocation3]
        %707 = vst.msk [vmem:[%s706] sm:$0xff] %vm323, %v705
        %710 = vrot.lane.b32.xlu0 %v606, 112
        %v711 = vpop.permute.xlu0 %710
        %712 = vrot.lane.b32.xlu0 %v607, 112
        %v713 = vpop.permute.xlu0 %712
        %v717 = vsel %vm323, %v705, 0
        %719 = vmatprep.subr.mxu0 0.0
        %720 = vmatpush1.msra.mxu0 0.0
        %721 = vmatprep.subr.mxu0 0.0
        %722 = vmatpush1.msra.mxu0 0.0
        %723 = vmatprep.subr.mxu0 0.0
        %724 = vmatpush1.msra.mxu0 0.0
        %725 = vmatprep.subr.mxu0 0.0
        %726 = vmatpush1.msra.mxu0 0.0
        %727 = vmatprep.subr.mxu0 0.0
        %728 = vmatpush1.msra.mxu0 0.0
        %729 = vmatprep.subr.mxu0 0.0
        %730 = vmatpush1.msra.mxu0 0.0
        %731 = vmatprep.subr.mxu0 0.0
        %732 = vmatpush1.msra.mxu0 0.0
        %733 = vmatprep.subr.mxu0 0.0
        %734 = vmatpush1.msra.mxu0 0.0
        %735 = vmatprep.subr.mxu0 0.0
        %736 = vmatpush1.msra.mxu0 0.0
        %737 = vmatprep.subr.mxu0 0.0
        %738 = vmatpush1.msra.mxu0 0.0
        %739 = vmatprep.subr.mxu0 0.0
        %740 = vmatpush1.msra.mxu0 0.0
        %741 = vmatprep.subr.mxu0 0.0
        %742 = vmatpush1.msra.mxu0 0.0
        %743 = vmatprep.subr.mxu0 0.0
        %744 = vmatpush1.msra.mxu0 0.0
        %745 = vmatprep.subr.mxu0 0.0
        %746 = vmatpush1.msra.mxu0 0.0
        %747 = vmatprep.subr.mxu0 0.0
        %748 = vmatpush1.msra.mxu0 %v713
        %749 = vmatprep.subr.mxu0 0.0
        %750 = vmatpush1.msra.mxu0 %v711
        %751 = vmatprep.subr.mxu0 0.0
        %752 = vmatpush2.msra.mxu0 0.0
        %753 = vmatprep.subr.mxu0 0.0
        %754 = vmatpush2.msra.mxu0 0.0
        %755 = vmatprep.subr.mxu0 0.0
        %756 = vmatpush2.msra.mxu0 0.0
        %757 = vmatprep.subr.mxu0 0.0
        %758 = vmatpush2.msra.mxu0 0.0
        %759 = vmatprep.subr.mxu0 0.0
        %760 = vmatpush2.msra.mxu0 0.0
        %761 = vmatprep.subr.mxu0 0.0
        %762 = vmatpush2.msra.mxu0 0.0
        %763 = vmatprep.subr.mxu0 0.0
        %764 = vmatpush2.msra.mxu0 0.0
        %765 = vmatprep.subr.mxu0 0.0
        %766 = vmatpush2.msra.mxu0 0.0
        %767 = vmatprep.subr.mxu0 0.0
        %768 = vmatpush2.msra.mxu0 0.0
        %769 = vmatprep.subr.mxu0 0.0
        %770 = vmatpush2.msra.mxu0 0.0
        %771 = vmatprep.subr.mxu0 0.0
        %772 = vmatpush2.msra.mxu0 0.0
        %773 = vmatprep.subr.mxu0 0.0
        %774 = vmatpush2.msra.mxu0 0.0
        %775 = vmatprep.subr.mxu0 0.0
        %776 = vmatpush2.msra.mxu0 0.0
        %777 = vmatprep.subr.mxu0 0.0
        %778 = vmatpush2.msra.mxu0 0.0
        %779 = vmatprep.subr.mxu0 0.0
        %780 = vmatpush2.msra.mxu0 0.0
        %781 = vmatprep.subr.mxu0 0.0
        %782 = vmatpush2.msra.mxu0 0.0
        %783 = vmatprep.mubr.f32.mxu0 0.0
        %784 = vmatmul.mubr.f32.gmra.mxu0 %v717
        %v785 = vpop.f32.mrf.mxu0
        %v786 = vadd.f32 0.0, %v785
        %v787 = vpop.f32.mrf.mxu0
        %788 = vdwg.mxu0
        %790 = vrot.lane.b32.xlu0 %v786, 16
        %v791 = vpop.permute.xlu0 %790
        %vm793 = vcmask 195712
        %794 = vst.msk [vmem:[#allocation2] sm:$0xff] %vm793, %v791
        %v795 = vld [vmem:[%s229] sm:$0xff]
        %v796 = vld [vmem:[%s1] sm:$0xff]
        %v797 = vld [vmem:[%s1 + $0x8] sm:$0xff]
        %v798 = vld [vmem:[%s2] sm:$0xff]
        %v799 = vld [vmem:[%s2 + $0x8] sm:$0xff]
        %801 = vrot.lane.b32.xlu0 %v795, 104
        %v802 = vpop.permute.xlu0 %801
        %805 = vrot.lane.b32.xlu0 %v796, 104
        %v806 = vpop.permute.xlu0 %805
        %807 = vrot.lane.b32.xlu0 %v797, 104
        %v808 = vpop.permute.xlu0 %807
        %v809 = vsel %vm242, %v802, 0
        %v811 = vsel %vm242, %v806, 0
        %v813 = vsel %vm242, %v808, 0
        %815 = vmatprep.subr.mxu0 0.0
        %816 = vmatpush1.xpose.msra.mxu0 0.0
        %817 = vmatprep.subr.mxu0 0.0
        %818 = vmatpush1.xpose.msra.mxu0 0.0
        %819 = vmatprep.subr.mxu0 0.0
        %820 = vmatpush1.xpose.msra.mxu0 0.0
        %821 = vmatprep.subr.mxu0 0.0
        %822 = vmatpush1.xpose.msra.mxu0 0.0
        %823 = vmatprep.subr.mxu0 0.0
        %824 = vmatpush1.xpose.msra.mxu0 0.0
        %825 = vmatprep.subr.mxu0 0.0
        %826 = vmatpush1.xpose.msra.mxu0 0.0
        %827 = vmatprep.subr.mxu0 0.0
        %828 = vmatpush1.xpose.msra.mxu0 0.0
        %829 = vmatprep.subr.mxu0 0.0
        %830 = vmatpush1.xpose.msra.mxu0 0.0
        %831 = vmatprep.subr.mxu0 0.0
        %832 = vmatpush1.xpose.msra.mxu0 0.0
        %833 = vmatprep.subr.mxu0 0.0
        %834 = vmatpush1.xpose.msra.mxu0 0.0
        %835 = vmatprep.subr.mxu0 0.0
        %836 = vmatpush1.xpose.msra.mxu0 0.0
        %837 = vmatprep.subr.mxu0 0.0
        %838 = vmatpush1.xpose.msra.mxu0 0.0
        %839 = vmatprep.subr.mxu0 0.0
        %840 = vmatpush1.xpose.msra.mxu0 0.0
        %841 = vmatprep.subr.mxu0 0.0
        %842 = vmatpush1.xpose.msra.mxu0 0.0
        %843 = vmatprep.subr.mxu0 0.0
        %844 = vmatpush1.xpose.msra.mxu0 %v813
        %845 = vmatprep.subr.mxu0 0.0
        %846 = vmatpush1.xpose.msra.mxu0 %v811
        %847 = vmatprep.subr.mxu0 0.0
        %848 = vmatpush2.xpose.msra.mxu0 0.0
        %849 = vmatprep.subr.mxu0 0.0
        %850 = vmatpush2.xpose.msra.mxu0 0.0
        %851 = vmatprep.subr.mxu0 0.0
        %852 = vmatpush2.xpose.msra.mxu0 0.0
        %853 = vmatprep.subr.mxu0 0.0
        %854 = vmatpush2.xpose.msra.mxu0 0.0
        %855 = vmatprep.subr.mxu0 0.0
        %856 = vmatpush2.xpose.msra.mxu0 0.0
        %857 = vmatprep.subr.mxu0 0.0
        %858 = vmatpush2.xpose.msra.mxu0 0.0
        %859 = vmatprep.subr.mxu0 0.0
        %860 = vmatpush2.xpose.msra.mxu0 0.0
        %861 = vmatprep.subr.mxu0 0.0
        %862 = vmatpush2.xpose.msra.mxu0 0.0
        %863 = vmatprep.subr.mxu0 0.0
        %864 = vmatpush2.xpose.msra.mxu0 0.0
        %865 = vmatprep.subr.mxu0 0.0
        %866 = vmatpush2.xpose.msra.mxu0 0.0
        %867 = vmatprep.subr.mxu0 0.0
        %868 = vmatpush2.xpose.msra.mxu0 0.0
        %869 = vmatprep.subr.mxu0 0.0
        %870 = vmatpush2.xpose.msra.mxu0 0.0
        %871 = vmatprep.subr.mxu0 0.0
        %872 = vmatpush2.xpose.msra.mxu0 0.0
        %873 = vmatprep.subr.mxu0 0.0
        %874 = vmatpush2.xpose.msra.mxu0 0.0
        %875 = vmatprep.subr.mxu0 0.0
        %876 = vmatpush2.xpose.msra.mxu0 0.0
        %877 = vmatprep.subr.mxu0 0.0
        %878 = vmatpush2.xpose.msra.mxu0 0.0
        %879 = vmatprep.mubr.f32.mxu0 0.0
        %880 = vmatmul.mubr.f32.gmra.mxu0 %v809
        %v881 = vpop.f32.mrf.mxu0
        %v882 = vadd.f32 0.0, %v881
        %v883 = vpop.f32.mrf.mxu0
        %884 = vdwg.mxu0
        %v885 = vmul.f32 %v882, 0.35355338
        %v886 = vsel %vm323, %v885, -inf
        %887 = vmax.xlane.f32.xlu0 %v886
        %v888 = vpop.xlane.xlu0 %887
        %v889 = vsub.f32 %v885, %v888
        %v890 = vmul.f32 %v889, 1.442695
        %v891 = vpow.pop %v890
        %v892 = vsel %vm323, %v891, 0.0
        %893 = vadd.xlane.f32.xlu0 %v892
        %v894 = vpop.xlane.xlu0 %893
        %v895 = vrcp.pop %v894
        %v896 = vmul.f32 1.0, %v895
        %v897 = vmul.f32 %v891, %v896
        %s898 = scalar_lea.vmem %s222, 24 [#allocation3]
        %899 = vst.msk [vmem:[%s898] sm:$0xff] %vm323, %v897
        %902 = vrot.lane.b32.xlu0 %v798, 104
        %v903 = vpop.permute.xlu0 %902
        %904 = vrot.lane.b32.xlu0 %v799, 104
        %v905 = vpop.permute.xlu0 %904
        %v909 = vsel %vm323, %v897, 0
        %911 = vmatprep.subr.mxu0 0.0
        %912 = vmatpush1.msra.mxu0 0.0
        %913 = vmatprep.subr.mxu0 0.0
        %914 = vmatpush1.msra.mxu0 0.0
        %915 = vmatprep.subr.mxu0 0.0
        %916 = vmatpush1.msra.mxu0 0.0
        %917 = vmatprep.subr.mxu0 0.0
        %918 = vmatpush1.msra.mxu0 0.0
        %919 = vmatprep.subr.mxu0 0.0
        %920 = vmatpush1.msra.mxu0 0.0
        %921 = vmatprep.subr.mxu0 0.0
        %922 = vmatpush1.msra.mxu0 0.0
        %923 = vmatprep.subr.mxu0 0.0
        %924 = vmatpush1.msra.mxu0 0.0
        %925 = vmatprep.subr.mxu0 0.0
        %926 = vmatpush1.msra.mxu0 0.0
        %927 = vmatprep.subr.mxu0 0.0
        %928 = vmatpush1.msra.mxu0 0.0
        %929 = vmatprep.subr.mxu0 0.0
        %930 = vmatpush1.msra.mxu0 0.0
        %931 = vmatprep.subr.mxu0 0.0
        %932 = vmatpush1.msra.mxu0 0.0
        %933 = vmatprep.subr.mxu0 0.0
        %934 = vmatpush1.msra.mxu0 0.0
        %935 = vmatprep.subr.mxu0 0.0
        %936 = vmatpush1.msra.mxu0 0.0
        %937 = vmatprep.subr.mxu0 0.0
        %938 = vmatpush1.msra.mxu0 0.0
        %939 = vmatprep.subr.mxu0 0.0
        %940 = vmatpush1.msra.mxu0 %v905
        %941 = vmatprep.subr.mxu0 0.0
        %942 = vmatpush1.msra.mxu0 %v903
        %943 = vmatprep.subr.mxu0 0.0
        %944 = vmatpush2.msra.mxu0 0.0
        %945 = vmatprep.subr.mxu0 0.0
        %946 = vmatpush2.msra.mxu0 0.0
        %947 = vmatprep.subr.mxu0 0.0
        %948 = vmatpush2.msra.mxu0 0.0
        %949 = vmatprep.subr.mxu0 0.0
        %950 = vmatpush2.msra.mxu0 0.0
        %951 = vmatprep.subr.mxu0 0.0
        %952 = vmatpush2.msra.mxu0 0.0
        %953 = vmatprep.subr.mxu0 0.0
        %954 = vmatpush2.msra.mxu0 0.0
        %955 = vmatprep.subr.mxu0 0.0
        %956 = vmatpush2.msra.mxu0 0.0
        %957 = vmatprep.subr.mxu0 0.0
        %958 = vmatpush2.msra.mxu0 0.0
        %959 = vmatprep.subr.mxu0 0.0
        %960 = vmatpush2.msra.mxu0 0.0
        %961 = vmatprep.subr.mxu0 0.0
        %962 = vmatpush2.msra.mxu0 0.0
        %963 = vmatprep.subr.mxu0 0.0
        %964 = vmatpush2.msra.mxu0 0.0
        %965 = vmatprep.subr.mxu0 0.0
        %966 = vmatpush2.msra.mxu0 0.0
        %967 = vmatprep.subr.mxu0 0.0
        %968 = vmatpush2.msra.mxu0 0.0
        %969 = vmatprep.subr.mxu0 0.0
        %970 = vmatpush2.msra.mxu0 0.0
        %971 = vmatprep.subr.mxu0 0.0
        %972 = vmatpush2.msra.mxu0 0.0
        %973 = vmatprep.subr.mxu0 0.0
        %974 = vmatpush2.msra.mxu0 0.0
        %975 = vmatprep.mubr.f32.mxu0 0.0
        %976 = vmatmul.mubr.f32.gmra.mxu0 %v909
        %v977 = vpop.f32.mrf.mxu0
        %v978 = vadd.f32 0.0, %v977
        %v979 = vpop.f32.mrf.mxu0
        %980 = vdwg.mxu0
        %982 = vrot.lane.b32.xlu0 %v978, 24
        %v983 = vpop.permute.xlu0 %982
        %vm985 = vcmask 261312
        %986 = vst.msk [vmem:[#allocation2] sm:$0xff] %vm985, %v983
        %v987 = vld [vmem:[#allocation2] sm:$0xff]
        %vm988 = vcmask 261120
        %989 = vst.msk [vmem:[%s236] sm:$0xff] %vm988, %v987
        %p990 = scmp.lt.s32.totalorder %s23, 1
        %s991 = scalar_select %p990, %s23, 1
        %p992 = scmp.lt.s32.totalorder %s24, 0
        %s993 = scalar_select %p992, %s24, 0
        %s994 = sadd.s32 %s993, %s991
        %s995 = smul.addr %s994, 8
        %s996 = scalar_lea.vmem %s3, %s995
        %s997 = sand.u32 %s139, 1
        %s998 = scalar_lea.sflag [#allocation4], %s997
        %s999 = sand.u32 %s139, 1
        %s1000 = smul.addr %s999, 32
        %s1001 = scalar_lea.vmem [#allocation3], %s1000
        // Predicated region
        $region33: #{reprogramming_layer_forward.8} parent=31 // pred_check
          %p1002 = pneg %p121
        $region34: #{reprogramming_layer_forward.8} parent=31 // pred_check_branch
          %1004 = sbr.rel (%p1002) target = $region36
        $region35: #{reprogramming_layer_forward.8} parent=31 // pred_region
          _
        $region36: #{reprogramming_layer_forward.8} parent=31 // pred_fallthru
          _
        // Predicated region
        $region37: #{reprogramming_layer_forward.8} parent=31 // pred_check
          %p1005 = pneg %p149
        $region38: #{reprogramming_layer_forward.8} parent=31 // pred_check_branch
          %1007 = sbr.rel (%p1005) target = $region40
        $region39: #{reprogramming_layer_forward.8} parent=31 // pred_region
          %s1009 = ssub.s32 512, 512
          %1010 = vsyncadd %s998, %s1009
          %s1011 = smul.addr %s23, 4
          %s1012 = sadd.s32 %s24, %s1011
          %s1013 = smul.addr %s1012, 128
          %s1014 = scalar_lea.hbm %s4, %s1013
          %s1015 = sshll.u32 %s1001, 4
          %s1016 = int_to_ptr.vmem [resolvable:$true] %s1015
          %1021 = dma.vmem_to_hbm [thread:$0]  %s1016, 512, %s1014, %s998, 128, 128, 8
        $region40: #{reprogramming_layer_forward.8} parent=31 // pred_fallthru
          _
      $region32: #{reprogramming_layer_forward.8} parent=5 // pred_fallthru
        _
      %p1022 = scmp.le.s32.totalorder 2, %s14
      // Predicated region
      $region41: #{reprogramming_layer_forward.8} parent=5 // pred_check
        %p1023 = pneg %p1022
      $region42: #{reprogramming_layer_forward.8} parent=5 // pred_check_branch
        %1025 = sbr.rel (%p1023) target = $region44
      $region43: #{reprogramming_layer_forward.8} parent=5 // pred_region
        %s1026 = ssub.s32 %s14, 2
        // Predicated region
        $region45: #{reprogramming_layer_forward.8} parent=43 // pred_check
          %p1027 = pneg %p127
        $region46: #{reprogramming_layer_forward.8} parent=43 // pred_check_branch
          %1029 = sbr.rel (%p1027) target = $region48
        $region47: #{reprogramming_layer_forward.8} parent=43 // pred_region
          %p1030 = scmp.lt.s32.totalorder %s25, 1
          %s1031 = scalar_select %p1030, %s25, 1
          %p1032 = scmp.lt.s32.totalorder %s26, 0
          %s1033 = scalar_select %p1032, %s26, 0
          %s1034 = sadd.s32 %s1033, %s1031
          %s1035 = smul.addr %s1034, 8
          %s1036 = scalar_lea.vmem %s3, %s1035
        $region48: #{reprogramming_layer_forward.8} parent=43 // pred_fallthru
          _
        // Predicated region
        $region49: #{reprogramming_layer_forward.8} parent=43 // pred_check
          %p1037 = pneg %p155
        $region50: #{reprogramming_layer_forward.8} parent=43 // pred_check_branch
          %1039 = sbr.rel (%p1037) target = $region52
        $region51: #{reprogramming_layer_forward.8} parent=43 // pred_region
          %s1040 = sand.u32 %s140, 1
          %s1041 = scalar_lea.sflag [#allocation4], %s1040
          %s1042 = sand.u32 %s140, 1
          %s1043 = smul.addr %s1042, 32
          %s1044 = scalar_lea.vmem [#allocation3], %s1043
          %1045 = dma.done %s1041, 512
        $region52: #{reprogramming_layer_forward.8} parent=43 // pred_fallthru
          _
      $region44: #{reprogramming_layer_forward.8} parent=5 // pred_fallthru
        _
    $region6: #{reprogramming_layer_forward.8} parent=1 // loop_footer
      %s18 = sadd.s32 1, %s14
    $region7: #{reprogramming_layer_forward.8} parent=1 // loop_footer_branch
      %13 = sbr.rel target = $region3
    $region8: #{reprogramming_layer_forward.8} parent=1 // loop_exit
      _
    %1046 = vsyncpa [#allocation4], 1
    %s1047 = scalar_lea.sflag [#allocation4], 1
    %1048 = vsyncpa %s1047, 1

// kernel: reprogramming_layer_forward.9
$region0: #{reprogramming_layer_forward.9}
  #allocation0 [shape = 'u32[]', space=smem, size = 0x4, offset = 0x4, fixed_abs, tag = 'smem constant byte address 0x4 - core index']
  #allocation1 [shape = 'u32[144,128]{1,0:T(1,128)}', space=vmem, size = 0x12000, scoped, tag = 'internal scratch']
  #allocation2 [shape = 'f32[16,64]{1,0:T(8,128)}', space=vmem, size = 0x2000, scoped, tag = 'scratch operand']
  %s0 = inlined_call_operand.vmem [shape: f32[16,32], index: 0, kind: input, shape index: {}]
  %s1 = inlined_call_operand.vmem [shape: f32[64,32], index: 1, kind: input, shape index: {}]
  %s2 = inlined_call_operand.vmem [shape: f32[1,64], index: 2, kind: input, shape index: {}]
  %s3 = inlined_call_operand.hbm [shape: f32[16,64], index: 3, kind: output, shape index: {}]
  %s4 = sld [smem:[#allocation0]]
  $region30: #{reprogramming_layer_forward.9} parent=0
    _
  %s6 = ssub.s32 1, %s4
  %s7 = scalar_select 0, %s6, %s4
  $region1: #{reprogramming_layer_forward.9} parent=0
    #allocation3 [shape = 'u8[8192]{0}', space=vmem, size = 0x2000, scoped, tag = 'output window, operand 0, single buffered']
    #allocation4 [shape = 's32[1]{0}', space=sflag, size = 0x4, scoped, tag = 'scoped memory for reprogramming_layer_forward.9']
    %8 = vsyncpa [#allocation4], 0
    // Predicated region
    $region2: #{reprogramming_layer_forward.9} parent=1 // pred_check
      _
    $region3: #{reprogramming_layer_forward.9} parent=1 // pred_check_branch
      %10 = sbr.rel (0) target = $region5
    $region4: #{reprogramming_layer_forward.9} parent=1 // pred_region
      _
    $region5: #{reprogramming_layer_forward.9} parent=1 // pred_fallthru
      _
    // Predicated region
    $region6: #{reprogramming_layer_forward.9} parent=1 // pred_check
      _
    $region7: #{reprogramming_layer_forward.9} parent=1 // pred_check_branch
      %12 = sbr.rel (0) target = $region9
    $region8: #{reprogramming_layer_forward.9} parent=1 // pred_region
      _
    $region9: #{reprogramming_layer_forward.9} parent=1 // pred_fallthru
      _
    // Predicated region
    $region10: #{reprogramming_layer_forward.9} parent=1 // pred_check
      _
    $region11: #{reprogramming_layer_forward.9} parent=1 // pred_check_branch
      %14 = sbr.rel (0) target = $region13
    $region12: #{reprogramming_layer_forward.9} parent=1 // pred_region
      _
    $region13: #{reprogramming_layer_forward.9} parent=1 // pred_fallthru
      _
    %p15 = scmp.eq.s32.totalorder 0, 0
    // Predicated region
    $region14: #{reprogramming_layer_forward.9} parent=1 // pred_check
      %p16 = pneg %p15
    $region15: #{reprogramming_layer_forward.9} parent=1 // pred_check_branch
      %18 = sbr.rel (%p16) target = $region17
    $region16: #{reprogramming_layer_forward.9} parent=1 // pred_region
      %vm19 = vcmask 523264
      %20 = vst.msk [vmem:[#allocation2] sm:$0xff] %vm19, 0.0
      %21 = vst.msk [vmem:[#allocation2 + $0x8] sm:$0xff] %vm19, 0.0
    $region17: #{reprogramming_layer_forward.9} parent=1 // pred_fallthru
      _
    %v22 = vld [vmem:[%s0] sm:$0xff]
    %v23 = vld [vmem:[%s0 + $0x8] sm:$0xff]
    %v24 = vld [vmem:[%s1] sm:$0xff]
    %v25 = vld [vmem:[%s1 + $0x8] sm:$0xff]
    %v26 = vld [vmem:[%s1 + $0x10] sm:$0xff]
    %v27 = vld [vmem:[%s1 + $0x18] sm:$0xff]
    %v28 = vld [vmem:[%s1 + $0x20] sm:$0xff]
    %v29 = vld [vmem:[%s1 + $0x28] sm:$0xff]
    %v30 = vld [vmem:[%s1 + $0x30] sm:$0xff]
    %v31 = vld [vmem:[%s1 + $0x38] sm:$0xff]
    %v32 = vld [vmem:[#allocation2] sm:$0xff]
    %v33 = vld [vmem:[#allocation2 + $0x8] sm:$0xff]
    %vm34 = vcmask 261120
    %v36 = vsel %vm34, %v22, 0
    %v39 = vsel %vm34, %v23, 0
    %v42 = vsel %vm34, %v24, 0
    %v45 = vsel %vm34, %v25, 0
    %v48 = vsel %vm34, %v26, 0
    %v51 = vsel %vm34, %v27, 0
    %v54 = vsel %vm34, %v28, 0
    %v57 = vsel %vm34, %v29, 0
    %v60 = vsel %vm34, %v30, 0
    %v63 = vsel %vm34, %v31, 0
    %65 = vmatprep.subr.mxu0 0.0
    %66 = vmatpush1.xpose.msra.mxu0 0.0
    %67 = vmatprep.subr.mxu0 0.0
    %68 = vmatpush1.xpose.msra.mxu0 0.0
    %69 = vmatprep.subr.mxu0 0.0
    %70 = vmatpush1.xpose.msra.mxu0 0.0
    %71 = vmatprep.subr.mxu0 0.0
    %72 = vmatpush1.xpose.msra.mxu0 0.0
    %73 = vmatprep.subr.mxu0 0.0
    %74 = vmatpush1.xpose.msra.mxu0 0.0
    %75 = vmatprep.subr.mxu0 0.0
    %76 = vmatpush1.xpose.msra.mxu0 0.0
    %77 = vmatprep.subr.mxu0 0.0
    %78 = vmatpush1.xpose.msra.mxu0 0.0
    %79 = vmatprep.subr.mxu0 0.0
    %80 = vmatpush1.xpose.msra.mxu0 0.0
    %81 = vmatprep.subr.mxu0 0.0
    %82 = vmatpush1.xpose.msra.mxu0 %v63
    %83 = vmatprep.subr.mxu0 0.0
    %84 = vmatpush1.xpose.msra.mxu0 %v60
    %85 = vmatprep.subr.mxu0 0.0
    %86 = vmatpush1.xpose.msra.mxu0 %v57
    %87 = vmatprep.subr.mxu0 0.0
    %88 = vmatpush1.xpose.msra.mxu0 %v54
    %89 = vmatprep.subr.mxu0 0.0
    %90 = vmatpush1.xpose.msra.mxu0 %v51
    %91 = vmatprep.subr.mxu0 0.0
    %92 = vmatpush1.xpose.msra.mxu0 %v48
    %93 = vmatprep.subr.mxu0 0.0
    %94 = vmatpush1.xpose.msra.mxu0 %v45
    %95 = vmatprep.subr.mxu0 0.0
    %96 = vmatpush1.xpose.msra.mxu0 %v42
    %97 = vmatprep.subr.mxu0 0.0
    %98 = vmatpush2.xpose.msra.mxu0 0.0
    %99 = vmatprep.subr.mxu0 0.0
    %100 = vmatpush2.xpose.msra.mxu0 0.0
    %101 = vmatprep.subr.mxu0 0.0
    %102 = vmatpush2.xpose.msra.mxu0 0.0
    %103 = vmatprep.subr.mxu0 0.0
    %104 = vmatpush2.xpose.msra.mxu0 0.0
    %105 = vmatprep.subr.mxu0 0.0
    %106 = vmatpush2.xpose.msra.mxu0 0.0
    %107 = vmatprep.subr.mxu0 0.0
    %108 = vmatpush2.xpose.msra.mxu0 0.0
    %109 = vmatprep.subr.mxu0 0.0
    %110 = vmatpush2.xpose.msra.mxu0 0.0
    %111 = vmatprep.subr.mxu0 0.0
    %112 = vmatpush2.xpose.msra.mxu0 0.0
    %113 = vmatprep.subr.mxu0 0.0
    %114 = vmatpush2.xpose.msra.mxu0 0.0
    %115 = vmatprep.subr.mxu0 0.0
    %116 = vmatpush2.xpose.msra.mxu0 0.0
    %117 = vmatprep.subr.mxu0 0.0
    %118 = vmatpush2.xpose.msra.mxu0 0.0
    %119 = vmatprep.subr.mxu0 0.0
    %120 = vmatpush2.xpose.msra.mxu0 0.0
    %121 = vmatprep.subr.mxu0 0.0
    %122 = vmatpush2.xpose.msra.mxu0 0.0
    %123 = vmatprep.subr.mxu0 0.0
    %124 = vmatpush2.xpose.msra.mxu0 0.0
    %125 = vmatprep.subr.mxu0 0.0
    %126 = vmatpush2.xpose.msra.mxu0 0.0
    %127 = vmatprep.subr.mxu0 0.0
    %128 = vmatpush2.xpose.msra.mxu0 0.0
    %129 = vmatprep.mubr.f32.mxu0 0.0
    %130 = vmatmul.mubr.f32.gmra.mxu0 %v36
    %v131 = vpop.f32.mrf.mxu0
    %v132 = vadd.f32 0.0, %v131
    %v133 = vpop.f32.mrf.mxu0
    %134 = vmatprep.mubr.f32.mxu0 0.0
    %135 = vmatmul.mubr.f32.gmra.mxu0 %v39
    %v136 = vpop.f32.mrf.mxu0
    %v137 = vadd.f32 0.0, %v136
    %v138 = vpop.f32.mrf.mxu0
    %139 = vdwg.mxu0
    %v140 = vadd.f32 %v32, %v132
    %v141 = vadd.f32 %v33, %v137
    %vm142 = vcmask 523264
    %143 = vst.msk [vmem:[#allocation2] sm:$0xff] %vm142, %v140
    %144 = vst.msk [vmem:[#allocation2 + $0x8] sm:$0xff] %vm142, %v141
    // Predicated region
    $region18: #{reprogramming_layer_forward.9} parent=1 // pred_check
      %p145 = pneg %p15
    $region19: #{reprogramming_layer_forward.9} parent=1 // pred_check_branch
      %147 = sbr.rel (%p145) target = $region21
    $region20: #{reprogramming_layer_forward.9} parent=1 // pred_region
      %v148 = vld [vmem:[#allocation2] sm:$0xff]
      %v149 = vld [vmem:[#allocation2 + $0x8] sm:$0xff]
      %v150 = vld [vmem:[%s2] sm:$0x1]
      %v152 = vlaneseq
      %v153 = vshrl.u32 %v152, 7
      %v154 = vsub.s32 0, %v153
      %v155 = vrot.slane %v150, %v154
      %v157 = vadd.f32 %v148, %v155
      %v158 = vadd.f32 %v149, %v155
      %159 = vst.msk [vmem:[#allocation3] sm:$0xff] %vm142, %v157
      %160 = vst.msk [vmem:[#allocation3 + $0x8] sm:$0xff] %vm142, %v158
    $region21: #{reprogramming_layer_forward.9} parent=1 // pred_fallthru
      _
    // Predicated region
    $region22: #{reprogramming_layer_forward.9} parent=1 // pred_check
      _
    $region23: #{reprogramming_layer_forward.9} parent=1 // pred_check_branch
      %162 = sbr.rel (0) target = $region25
    $region24: #{reprogramming_layer_forward.9} parent=1 // pred_region
      %s164 = ssub.s32 256, 256
      %165 = vsyncadd [#allocation4], %s164
      %s166 = sshll.u32 [#allocation3], 4
      %s167 = int_to_ptr.vmem [resolvable:$true] %s166
      %172 = dma.vmem_to_hbm [thread:$0]  %s167, 256, %s3, [#allocation4], 128, 128, 8
    $region25: #{reprogramming_layer_forward.9} parent=1 // pred_fallthru
      _
    // Predicated region
    $region26: #{reprogramming_layer_forward.9} parent=1 // pred_check
      _
    $region27: #{reprogramming_layer_forward.9} parent=1 // pred_check_branch
      %174 = sbr.rel (0) target = $region29
    $region28: #{reprogramming_layer_forward.9} parent=1 // pred_region
      %175 = dma.done [#allocation4], 256
    $region29: #{reprogramming_layer_forward.9} parent=1 // pred_fallthru
      _
    %176 = vsyncpa [#allocation4], 1

</llo_original>
